<compile_context>
chip_gen: v6e
topology: v6e:2x2x1
jax: 0.10.0
libtpu: 0.0.40
codegen_flags: <defaults>
</compile_context>

<pallas_src>
import jax
import jax.numpy as jnp
from jax.experimental import pallas as pl
from jax.experimental.pallas import tpu as pltpu


# ---------------------------------------------------------------------------
# Fused kernel: per-index proj+ReLU, attention logit, single fused matmul
# ---------------------------------------------------------------------------
def _seg_head_kernel(x_ref, w1_ref, b1_ref, wa_ref, ba_ref, wfuse_ref, cb_ref, out_ref):
    # x_ref    : (idx, 1, C1, S) f32   tokens (lane axis S) for one batch / spatial tile
    # w1_ref   : (idx, E, C1)    bf16  proj weight (nn.Linear: out x in)
    # b1_ref   : (idx, E, 1)     f32   proj bias
    # wa_ref   : (idx, E, 1)     f32   composed attention weight  wa'_i = W2_i^T @ wa_i
    # ba_ref   : (1,)            f32   composed attention bias (SMEM scalar)
    # wfuse_ref: (E, idx*E)      bf16  composed fuse weight  [Wf_0@W2_0 | Wf_1@W2_1 | ...]
    # cb_ref   : (2, E, 1)       f32   row 0: cf = sum_i Wf_i@b2_i ; row 1: bf
    # out_ref  : (1, E, S)       bf16
    idx = x_ref.shape[0]
    S = x_ref.shape[-1]
    mxu_dtype = w1_ref.dtype

    att_logit = jnp.zeros((1, S), jnp.float32)
    h_parts = []
    for i in range(idx):                                    # static unroll; idx is small
        x_i = x_ref[i, 0].astype(mxu_dtype)                 # f32 -> bf16 in-kernel (hidden VPU op)
        h = jnp.dot(w1_ref[i], x_i, preferred_element_type=jnp.float32)
        h = jnp.maximum(h + b1_ref[i], 0.0)                 # (E, S) f32, ReLU
        # attention-logit contribution: VPU multiply + sublane (XLU) reduce — free filler
        att_logit = att_logit + jnp.sum(h * wa_ref[i], axis=0, keepdims=True)
        h_parts.append(h.astype(mxu_dtype))

    # Single K = idx*E contraction instead of idx separate accumulating E x E dots.
    H = jnp.concatenate(h_parts, axis=0)                    # (idx*E, S) bf16
    acc = jnp.dot(wfuse_ref[...], H, preferred_element_type=jnp.float32)   # (E, S) f32

    att = jax.nn.sigmoid(att_logit + ba_ref[0])             # (1, S) f32
    # Wf @ (cat*att) == (Wf@cat)*att ; cf is part of Wf@cat so it is added BEFORE *att.
    out = (acc + cb_ref[0]) * att + cb_ref[1]               # (E, S) f32
    out_ref[...] = out[None].astype(out_ref.dtype)


def _pick_tile(hw_padded):
    # hw_padded is always a multiple of 128, so this always returns a 128-multiple.
    for t in (1024, 512, 256, 128):
        if hw_padded % t == 0:
            return t
    return 128


# ---------------------------------------------------------------------------
# Wrapper
# ---------------------------------------------------------------------------
def segformer_head_forward(x_all, params, *, tile_s=None,
                           mxu_dtype=jnp.bfloat16, out_dtype=jnp.bfloat16):
    """x_all: (index, N, C1, H, W) f32  ->  (N, E, H, W) out_dtype."""
    idx, N, C1, H, W = x_all.shape
    E = params["w1"].shape[1]
    K = idx * E
    HW = H * W

    # Pure reshape (no HBM transpose); keep f32 — the bf16 cast happens inside the kernel.
    x = x_all.reshape(idx, N, C1, HW)
    # Pad the token axis to a multiple of 128 so stores are always lane-dense.
    HW_p = ((HW + 127) // 128) * 128
    if HW_p != HW:
        x = jnp.pad(x, ((0, 0), (0, 0), (0, 0), (0, HW_p - HW)))
    S = _pick_tile(HW_p) if tile_s is None else tile_s
    assert HW_p % S == 0 and S % 128 == 0
    n_s = HW_p // S

    f32 = jnp.float32
    w1 = params["w1"].astype(mxu_dtype)                          # (idx, E, C1)
    b1 = params["b1"].astype(f32).reshape(idx, E, 1)
    w2 = params["w2"].astype(f32)                                # (idx, E, E)
    b2 = params["b2"].astype(f32)                                # (idx, E)
    wa = params["wa"].astype(f32).reshape(idx, E)                # per-index rows of 1x1 conv
    ba = params["ba"].astype(f32).reshape(1)
    wf = params["wf"].astype(f32).reshape(E, idx, E).transpose(1, 0, 2)   # (idx, E, E)
    bf = params["bf"].astype(f32).reshape(E, 1)

    # ---- algebraic composition (f32, single cast to bf16) ----
    #   y_i = W2_i h_i + b2_i
    #   Wf @ cat(y) = sum_i (Wf_i W2_i) h_i + sum_i Wf_i b2_i
    #   wa @ cat(y) = sum_i (wa_i W2_i) h_i + sum_i wa_i·b2_i
    wfuse = jnp.einsum('iab,ibc->iac', wf, w2)                   # (idx, E, E)
    wfuse = wfuse.transpose(1, 0, 2).reshape(E, K).astype(mxu_dtype)      # (E, idx*E)
    wa_c = jnp.einsum('ib,ibc->ic', wa, w2).reshape(idx, E, 1)            # column form
    cf = jnp.einsum('iab,ib->a', wf, b2).reshape(E, 1)                    # pre-attention constant
    ba_c = (ba + jnp.einsum('ib,ib->', wa, b2)).reshape(1)                # scalar -> SMEM
    cb = jnp.stack([cf, bf], axis=0)                                      # (2, E, 1)

    T = N * HW_p
    out_bytes = jnp.dtype(out_dtype).itemsize
    flops = T * (idx * 2 * C1 * E + 2 * K * E + 2 * K)
    bytes_accessed = (x.size * 4 + T * E * out_bytes
                      + (w1.size + wfuse.size) * 2
                      + (b1.size + wa_c.size + cb.size + 1) * 4)

    out_tok = pl.pallas_call(
        _seg_head_kernel,
        out_shape=jax.ShapeDtypeStruct((N, E, HW_p), out_dtype),
        grid_spec=pltpu.PrefetchScalarGridSpec(
            num_scalar_prefetch=0,
            grid=(N, n_s),
            in_specs=[
                pl.BlockSpec((idx, 1, C1, S), lambda n, s: (0, n, 0, s)),   # x (tiled, f32)
                pl.BlockSpec((idx, E, C1), lambda n, s: (0, 0, 0)),         # w1 (resident)
                pl.BlockSpec((idx, E, 1), lambda n, s: (0, 0, 0)),          # b1
                pl.BlockSpec((idx, E, 1), lambda n, s: (0, 0, 0)),          # wa'
                pl.BlockSpec(memory_space=pltpu.MemorySpace.SMEM),          # ba' (scalar)
                pl.BlockSpec((E, K), lambda n, s: (0, 0)),                  # composed fuse weight
                pl.BlockSpec((2, E, 1), lambda n, s: (0, 0, 0)),            # cf / bf pack
            ],
            out_specs=pl.BlockSpec((1, E, S), lambda n, s: (n, 0, s)),
        ),
        compiler_params=pltpu.CompilerParams(
            dimension_semantics=("parallel", "parallel"),
            vmem_limit_bytes=32 * 1024 * 1024,
        ),
        cost_estimate=pl.CostEstimate(
            flops=flops, transcendentals=T, bytes_accessed=bytes_accessed),
    )(x, w1, b1, wa_c, ba_c, wfuse, cb)

    # (N, E, HW_p) -> strip token padding -> (N, E, H, W): pure reshape, no transpose.
    if HW_p != HW:
        out_tok = out_tok[:, :, :HW]
    return out_tok.reshape(N, E, H, W)


# ---------------------------------------------------------------------------
# Pure-JAX f32 reference (mirrors the PyTorch forward)
# ---------------------------------------------------------------------------
def reference_forward(x_all, params):
    idx, N, C1, H, W = x_all.shape
    E = params["w1"].shape[1]
    K = idx * E
    xs = []
    for i in range(idx):
        xt = x_all[i].reshape(N, C1, H * W).transpose(0, 2, 1)          # (N, HW, C1)
        h = jnp.maximum(xt @ params["w1"][i].T + params["b1"][i], 0.0)
        y = h @ params["w2"][i].T + params["b2"][i]                     # (N, HW, E)
        xs.append(y.transpose(0, 2, 1).reshape(N, E, H, W))
    cat = jnp.concatenate(xs, axis=1)                                   # (N, K, H, W)
    cat_tok = cat.reshape(N, K, H * W).transpose(0, 2, 1)               # (N, HW, K)
    att = jax.nn.sigmoid(cat_tok @ params["wa"].T + params["ba"])       # (N, HW, 1)
    fused = (cat_tok * att) @ params["wf"].T + params["bf"]             # (N, HW, E)
    return fused.transpose(0, 2, 1).reshape(N, E, H, W)


# ---------------------------------------------------------------------------
# Main
# ---------------------------------------------------------------------------
if __name__ == "__main__":
    # Small shapes consistent with the module: index=3 MLP branches,
    # in_channels c1=32, embedding_dim=128, batch N=2, spatial H=W=16.
    INDEX, C1, E = 3, 32, 128
    N, H, W = 2, 16, 16
    K = INDEX * E

    key = jax.random.PRNGKey(0)
    keys = jax.random.split(key, 9)

    # Parameters stored in PyTorch-native shapes (nn.Linear weight: out x in;
    # 1x1-conv weights squeezed to 2D).
    params = {
        "w1": jax.random.normal(keys[0], (INDEX, E, C1), jnp.float32) * 0.05,
        "b1": jax.random.normal(keys[1], (INDEX, E), jnp.float32) * 0.01,
        "w2": jax.random.normal(keys[2], (INDEX, E, E), jnp.float32) * 0.05,
        "b2": jax.random.normal(keys[3], (INDEX, E), jnp.float32) * 0.01,
        "wa": jax.random.normal(keys[4], (1, K), jnp.float32) * 0.05,
        "ba": jax.random.normal(keys[5], (1,), jnp.float32) * 0.01,
        "wf": jax.random.normal(keys[6], (E, K), jnp.float32) * 0.05,
        "bf": jax.random.normal(keys[7], (E,), jnp.float32) * 0.01,
    }

    # Input matching the PyTorch forward: x_all of shape (index, N, C1, H, W).
    x_all = jax.random.normal(keys[8], (INDEX, N, C1, H, W), jnp.float32)

    out = jax.block_until_ready(segformer_head_forward(x_all, params))
    ref = jax.block_until_ready(reference_forward(x_all, params))

    assert out.shape == (N, E, H, W), out.shape
    assert jnp.all(jnp.isfinite(out.astype(jnp.float32)))
    out_f32 = out.astype(jnp.float32)
    max_err = float(jnp.max(jnp.abs(out_f32 - ref)))
    assert jnp.allclose(out_f32, ref, atol=2e-2, rtol=2e-2), max_err

    print("KERNEL_OK")
</pallas_src>

<mosaic_0001>
module attributes {stable_mosaic.version = 11 : i64} {
  func.func @_seg_head_kernel(%arg0: i32, %arg1: i32, %arg2: memref<3x1x32x256xf32, #tpu.memory_space<vmem>>, %arg3: memref<3x128x32xbf16, #tpu.memory_space<vmem>>, %arg4: memref<3x128x1xf32, #tpu.memory_space<vmem>>, %arg5: memref<3x128x1xf32, #tpu.memory_space<vmem>>, %arg6: memref<1xf32, #tpu.memory_space<smem>>, %arg7: memref<128x384xbf16, #tpu.memory_space<vmem>>, %arg8: memref<2x128x1xf32, #tpu.memory_space<vmem>>, %arg9: memref<1x128x256xbf16, #tpu.memory_space<vmem>>) attributes {dimension_semantics = [#tpu.dimension_semantics<parallel>, #tpu.dimension_semantics<parallel>], iteration_bounds = array<i64: 2, 1>, scalar_prefetch = 0 : i64, scratch_operands = 0 : i64, tpu.core_type = #tpu.core_type<tc>, window_params = [{transform_indices = @transform_0, window_bounds = array<i64: 3, 1, 32, 256>}, {pipeline_mode = #tpu.pipeline_mode<synchronous>, transform_indices = @transform_1, window_bounds = array<i64: 3, 128, 32>}, {pipeline_mode = #tpu.pipeline_mode<synchronous>, transform_indices = @transform_2, window_bounds = array<i64: 3, 128, 1>}, {pipeline_mode = #tpu.pipeline_mode<synchronous>, transform_indices = @transform_3, window_bounds = array<i64: 3, 128, 1>}, {transform_indices = @transform_4, window_bounds = array<i64: 1>}, {pipeline_mode = #tpu.pipeline_mode<synchronous>, transform_indices = @transform_5, window_bounds = array<i64: 128, 384>}, {pipeline_mode = #tpu.pipeline_mode<synchronous>, transform_indices = @transform_6, window_bounds = array<i64: 2, 128, 1>}, {transform_indices = @transform_7, window_bounds = array<i64: 1, 128, 256>}]} {
    %cst = arith.constant 0.000000e+00 : f32
    %0 = vector.broadcast %cst : f32 to vector<1x256xf32>
    %c0 = arith.constant 0 : index
    %c0_0 = arith.constant 0 : index
    %c0_1 = arith.constant 0 : index
    %c0_2 = arith.constant 0 : index
    %1 = vector.load %arg2[%c0, %c0_0, %c0_1, %c0_2] : memref<3x1x32x256xf32, #tpu.memory_space<vmem>>, vector<1x1x32x256xf32>
    %2 = vector.shape_cast %1 : vector<1x1x32x256xf32> to vector<32x256xf32>
    %3 = arith.truncf %2 : vector<32x256xf32> to vector<32x256xbf16>
    %c0_3 = arith.constant 0 : index
    %c0_4 = arith.constant 0 : index
    %c0_5 = arith.constant 0 : index
    %4 = vector.load %arg3[%c0_3, %c0_4, %c0_5] : memref<3x128x32xbf16, #tpu.memory_space<vmem>>, vector<1x128x32xbf16>
    %5 = vector.shape_cast %4 : vector<1x128x32xbf16> to vector<128x32xbf16>
    %cst_6 = arith.constant dense<0.000000e+00> : vector<128x256xf32>
    %6 = tpu.matmul %5, %3, %cst_6 {dimension_numbers = #tpu.dot_dimension_numbers<[1], [0], [0], [1], [0, 0, 1, 1], [], []>} : vector<128x32xbf16>, vector<32x256xbf16>, vector<128x256xf32> -> vector<128x256xf32>
    %c0_7 = arith.constant 0 : index
    %c0_8 = arith.constant 0 : index
    %c0_9 = arith.constant 0 : index
    %7 = vector.load %arg4[%c0_7, %c0_8, %c0_9] : memref<3x128x1xf32, #tpu.memory_space<vmem>>, vector<1x128x1xf32>
    %8 = vector.shape_cast %7 : vector<1x128x1xf32> to vector<128x1xf32>
    %9 = vector.broadcast %8 : vector<128x1xf32> to vector<128x256xf32>
    %10 = arith.addf %6, %9 : vector<128x256xf32>
    %cst_10 = arith.constant 0.000000e+00 : f32
    %11 = vector.broadcast %cst_10 : f32 to vector<128x256xf32>
    %12 = arith.maximumf %10, %11 : vector<128x256xf32>
    %c0_11 = arith.constant 0 : index
    %c0_12 = arith.constant 0 : index
    %c0_13 = arith.constant 0 : index
    %13 = vector.load %arg5[%c0_11, %c0_12, %c0_13] : memref<3x128x1xf32, #tpu.memory_space<vmem>>, vector<1x128x1xf32>
    %14 = vector.shape_cast %13 : vector<1x128x1xf32> to vector<128x1xf32>
    %15 = vector.broadcast %14 : vector<128x1xf32> to vector<128x256xf32>
    %16 = arith.mulf %12, %15 : vector<128x256xf32>
    %cst_14 = arith.constant dense<0.000000e+00> : vector<256xf32>
    %17 = vector.multi_reduction <add>, %16, %cst_14 [0] : vector<128x256xf32> to vector<256xf32>
    %18 = vector.shape_cast %17 : vector<256xf32> to vector<1x256xf32>
    %19 = arith.addf %0, %18 : vector<1x256xf32>
    %20 = arith.truncf %12 : vector<128x256xf32> to vector<128x256xbf16>
    %c1 = arith.constant 1 : index
    %c0_15 = arith.constant 0 : index
    %c0_16 = arith.constant 0 : index
    %c0_17 = arith.constant 0 : index
    %21 = vector.load %arg2[%c1, %c0_15, %c0_16, %c0_17] : memref<3x1x32x256xf32, #tpu.memory_space<vmem>>, vector<1x1x32x256xf32>
    %22 = vector.shape_cast %21 : vector<1x1x32x256xf32> to vector<32x256xf32>
    %23 = arith.truncf %22 : vector<32x256xf32> to vector<32x256xbf16>
    %c1_18 = arith.constant 1 : index
    %c0_19 = arith.constant 0 : index
    %c0_20 = arith.constant 0 : index
    %24 = vector.load %arg3[%c1_18, %c0_19, %c0_20] : memref<3x128x32xbf16, #tpu.memory_space<vmem>>, vector<1x128x32xbf16>
    %25 = vector.shape_cast %24 : vector<1x128x32xbf16> to vector<128x32xbf16>
    %cst_21 = arith.constant dense<0.000000e+00> : vector<128x256xf32>
    %26 = tpu.matmul %25, %23, %cst_21 {dimension_numbers = #tpu.dot_dimension_numbers<[1], [0], [0], [1], [0, 0, 1, 1], [], []>} : vector<128x32xbf16>, vector<32x256xbf16>, vector<128x256xf32> -> vector<128x256xf32>
    %c1_22 = arith.constant 1 : index
    %c0_23 = arith.constant 0 : index
    %c0_24 = arith.constant 0 : index
    %27 = vector.load %arg4[%c1_22, %c0_23, %c0_24] : memref<3x128x1xf32, #tpu.memory_space<vmem>>, vector<1x128x1xf32>
    %28 = vector.shape_cast %27 : vector<1x128x1xf32> to vector<128x1xf32>
    %29 = vector.broadcast %28 : vector<128x1xf32> to vector<128x256xf32>
    %30 = arith.addf %26, %29 : vector<128x256xf32>
    %cst_25 = arith.constant 0.000000e+00 : f32
    %31 = vector.broadcast %cst_25 : f32 to vector<128x256xf32>
    %32 = arith.maximumf %30, %31 : vector<128x256xf32>
    %c1_26 = arith.constant 1 : index
    %c0_27 = arith.constant 0 : index
    %c0_28 = arith.constant 0 : index
    %33 = vector.load %arg5[%c1_26, %c0_27, %c0_28] : memref<3x128x1xf32, #tpu.memory_space<vmem>>, vector<1x128x1xf32>
    %34 = vector.shape_cast %33 : vector<1x128x1xf32> to vector<128x1xf32>
    %35 = vector.broadcast %34 : vector<128x1xf32> to vector<128x256xf32>
    %36 = arith.mulf %32, %35 : vector<128x256xf32>
    %cst_29 = arith.constant dense<0.000000e+00> : vector<256xf32>
    %37 = vector.multi_reduction <add>, %36, %cst_29 [0] : vector<128x256xf32> to vector<256xf32>
    %38 = vector.shape_cast %37 : vector<256xf32> to vector<1x256xf32>
    %39 = arith.addf %19, %38 : vector<1x256xf32>
    %40 = arith.truncf %32 : vector<128x256xf32> to vector<128x256xbf16>
    %c2 = arith.constant 2 : index
    %c0_30 = arith.constant 0 : index
    %c0_31 = arith.constant 0 : index
    %c0_32 = arith.constant 0 : index
    %41 = vector.load %arg2[%c2, %c0_30, %c0_31, %c0_32] : memref<3x1x32x256xf32, #tpu.memory_space<vmem>>, vector<1x1x32x256xf32>
    %42 = vector.shape_cast %41 : vector<1x1x32x256xf32> to vector<32x256xf32>
    %43 = arith.truncf %42 : vector<32x256xf32> to vector<32x256xbf16>
    %c2_33 = arith.constant 2 : index
    %c0_34 = arith.constant 0 : index
    %c0_35 = arith.constant 0 : index
    %44 = vector.load %arg3[%c2_33, %c0_34, %c0_35] : memref<3x128x32xbf16, #tpu.memory_space<vmem>>, vector<1x128x32xbf16>
    %45 = vector.shape_cast %44 : vector<1x128x32xbf16> to vector<128x32xbf16>
    %cst_36 = arith.constant dense<0.000000e+00> : vector<128x256xf32>
    %46 = tpu.matmul %45, %43, %cst_36 {dimension_numbers = #tpu.dot_dimension_numbers<[1], [0], [0], [1], [0, 0, 1, 1], [], []>} : vector<128x32xbf16>, vector<32x256xbf16>, vector<128x256xf32> -> vector<128x256xf32>
    %c2_37 = arith.constant 2 : index
    %c0_38 = arith.constant 0 : index
    %c0_39 = arith.constant 0 : index
    %47 = vector.load %arg4[%c2_37, %c0_38, %c0_39] : memref<3x128x1xf32, #tpu.memory_space<vmem>>, vector<1x128x1xf32>
    %48 = vector.shape_cast %47 : vector<1x128x1xf32> to vector<128x1xf32>
    %49 = vector.broadcast %48 : vector<128x1xf32> to vector<128x256xf32>
    %50 = arith.addf %46, %49 : vector<128x256xf32>
    %cst_40 = arith.constant 0.000000e+00 : f32
    %51 = vector.broadcast %cst_40 : f32 to vector<128x256xf32>
    %52 = arith.maximumf %50, %51 : vector<128x256xf32>
    %c2_41 = arith.constant 2 : index
    %c0_42 = arith.constant 0 : index
    %c0_43 = arith.constant 0 : index
    %53 = vector.load %arg5[%c2_41, %c0_42, %c0_43] : memref<3x128x1xf32, #tpu.memory_space<vmem>>, vector<1x128x1xf32>
    %54 = vector.shape_cast %53 : vector<1x128x1xf32> to vector<128x1xf32>
    %55 = vector.broadcast %54 : vector<128x1xf32> to vector<128x256xf32>
    %56 = arith.mulf %52, %55 : vector<128x256xf32>
    %cst_44 = arith.constant dense<0.000000e+00> : vector<256xf32>
    %57 = vector.multi_reduction <add>, %56, %cst_44 [0] : vector<128x256xf32> to vector<256xf32>
    %58 = vector.shape_cast %57 : vector<256xf32> to vector<1x256xf32>
    %59 = arith.addf %39, %58 : vector<1x256xf32>
    %60 = arith.truncf %52 : vector<128x256xf32> to vector<128x256xbf16>
    %61 = tpu.concatenate %20, %40, %60 in 0 : vector<128x256xbf16>, vector<128x256xbf16>, vector<128x256xbf16> -> vector<384x256xbf16>
    %c0_45 = arith.constant 0 : index
    %c0_46 = arith.constant 0 : index
    %62 = vector.load %arg7[%c0_45, %c0_46] : memref<128x384xbf16, #tpu.memory_space<vmem>>, vector<128x384xbf16>
    %cst_47 = arith.constant dense<0.000000e+00> : vector<128x256xf32>
    %63 = tpu.matmul %62, %61, %cst_47 {dimension_numbers = #tpu.dot_dimension_numbers<[1], [0], [0], [1], [0, 0, 1, 1], [], []>} : vector<128x384xbf16>, vector<384x256xbf16>, vector<128x256xf32> -> vector<128x256xf32>
    %c0_48 = arith.constant 0 : index
    %64 = memref.load %arg6[%c0_48] : memref<1xf32, #tpu.memory_space<smem>>
    %65 = vector.broadcast %64 : f32 to vector<1x256xf32>
    %66 = arith.addf %59, %65 : vector<1x256xf32>
    %67 = arith.negf %66 : vector<1x256xf32>
    %68 = math.exp %67 : vector<1x256xf32>
    %cst_49 = arith.constant 1.000000e+00 : f32
    %69 = vector.broadcast %cst_49 : f32 to vector<1x256xf32>
    %70 = arith.addf %69, %68 : vector<1x256xf32>
    %71 = arith.divf %69, %70 : vector<1x256xf32>
    %c0_50 = arith.constant 0 : index
    %c0_51 = arith.constant 0 : index
    %c0_52 = arith.constant 0 : index
    %72 = vector.load %arg8[%c0_50, %c0_51, %c0_52] : memref<2x128x1xf32, #tpu.memory_space<vmem>>, vector<1x128x1xf32>
    %73 = vector.shape_cast %72 : vector<1x128x1xf32> to vector<128x1xf32>
    %74 = vector.broadcast %73 : vector<128x1xf32> to vector<128x256xf32>
    %75 = arith.addf %63, %74 : vector<128x256xf32>
    %76 = vector.broadcast %71 : vector<1x256xf32> to vector<128x256xf32>
    %77 = arith.mulf %75, %76 : vector<128x256xf32>
    %c1_53 = arith.constant 1 : index
    %c0_54 = arith.constant 0 : index
    %c0_55 = arith.constant 0 : index
    %78 = vector.load %arg8[%c1_53, %c0_54, %c0_55] : memref<2x128x1xf32, #tpu.memory_space<vmem>>, vector<1x128x1xf32>
    %79 = vector.shape_cast %78 : vector<1x128x1xf32> to vector<128x1xf32>
    %80 = vector.broadcast %79 : vector<128x1xf32> to vector<128x256xf32>
    %81 = arith.addf %77, %80 : vector<128x256xf32>
    %82 = vector.shape_cast %81 : vector<128x256xf32> to vector<1x128x256xf32>
    %83 = arith.truncf %82 : vector<1x128x256xf32> to vector<1x128x256xbf16>
    %c0_56 = arith.constant 0 : index
    %c0_57 = arith.constant 0 : index
    %c0_58 = arith.constant 0 : index
    %84 = vector.load %arg9[%c0_56, %c0_57, %c0_58] : memref<1x128x256xbf16, #tpu.memory_space<vmem>>, vector<1x128x256xbf16>
    tpu.vector_store %arg9[%c0_56, %c0_57, %c0_58], %83 {strides = array<i32>} : memref<1x128x256xbf16, #tpu.memory_space<vmem>>, vector<1x128x256xbf16>,
    return
  }
  func.func @transform_0(%arg0: i32, %arg1: i32) -> (i32, i32, i32, i32) {
    %c0_i32 = arith.constant 0 : i32
    %c0_i32_0 = arith.constant 0 : i32
    %c0_i32_1 = arith.constant 0 : i32
    return %c0_i32, %arg0, %c0_i32_0, %arg1 : i32, i32, i32, i32
  }
  func.func @transform_1(%arg0: i32, %arg1: i32) -> (i32, i32, i32) {
    %c0_i32 = arith.constant 0 : i32
    %c0_i32_0 = arith.constant 0 : i32
    %c0_i32_1 = arith.constant 0 : i32
    %c0_i32_2 = arith.constant 0 : i32
    return %c0_i32, %c0_i32_0, %c0_i32_1 : i32, i32, i32
  }
  func.func @transform_2(%arg0: i32, %arg1: i32) -> (i32, i32, i32) {
    %c0_i32 = arith.constant 0 : i32
    %c0_i32_0 = arith.constant 0 : i32
    %c0_i32_1 = arith.constant 0 : i32
    %c0_i32_2 = arith.constant 0 : i32
    return %c0_i32, %c0_i32_0, %c0_i32_1 : i32, i32, i32
  }
  func.func @transform_3(%arg0: i32, %arg1: i32) -> (i32, i32, i32) {
    %c0_i32 = arith.constant 0 : i32
    %c0_i32_0 = arith.constant 0 : i32
    %c0_i32_1 = arith.constant 0 : i32
    %c0_i32_2 = arith.constant 0 : i32
    return %c0_i32, %c0_i32_0, %c0_i32_1 : i32, i32, i32
  }
  func.func @transform_4(%arg0: i32, %arg1: i32) -> i32 {
    %c0_i32 = arith.constant 0 : i32
    %c0_i32_0 = arith.constant 0 : i32
    return %c0_i32 : i32
  }
  func.func @transform_5(%arg0: i32, %arg1: i32) -> (i32, i32) {
    %c0_i32 = arith.constant 0 : i32
    %c0_i32_0 = arith.constant 0 : i32
    %c0_i32_1 = arith.constant 0 : i32
    return %c0_i32, %c0_i32_0 : i32, i32
  }
  func.func @transform_6(%arg0: i32, %arg1: i32) -> (i32, i32, i32) {
    %c0_i32 = arith.constant 0 : i32
    %c0_i32_0 = arith.constant 0 : i32
    %c0_i32_1 = arith.constant 0 : i32
    %c0_i32_2 = arith.constant 0 : i32
    return %c0_i32, %c0_i32_0, %c0_i32_1 : i32, i32, i32
  }
  func.func @transform_7(%arg0: i32, %arg1: i32) -> (i32, i32, i32) {
    %c0_i32 = arith.constant 0 : i32
    %c0_i32_0 = arith.constant 0 : i32
    return %arg0, %c0_i32, %arg1 : i32, i32, i32
  }
}

</mosaic_0001>

<llo_original>
// kernel: tpu_custom_call.1
$region0: #{tpu_custom_call.1}
  #allocation0 [shape = 'u32[]', space=smem, size = 0x4, offset = 0x4, fixed_abs, tag = 'smem constant byte address 0x4 - core index']
  #allocation1 [shape = 'u32[144,128]{1,0:T(1,128)}', space=vmem, size = 0x12000, scoped, tag = 'internal scratch']
  #allocation2 [shape = 'f32[1]{0:T(128)S(6)}', space=smem, size = 0x200, scoped, tag = 'scoped memory for tpu_custom_call.1']
  %s0 = inlined_call_operand.vmem [shape: f32[3,2,32,256], index: 0, kind: input, shape index: {}]
  %s1 = inlined_call_operand.vmem [shape: bf16[3,128,32], index: 1, kind: input, shape index: {}]
  %s2 = inlined_call_operand.vmem [shape: f32[3,128,1], index: 2, kind: input, shape index: {}]
  %s3 = inlined_call_operand.vmem [shape: f32[3,128,1], index: 3, kind: input, shape index: {}]
  %s4 = inlined_call_operand.<no memory space> [shape: f32[1], index: 4, kind: input, shape index: {}]
  %s5 = inlined_call_operand.vmem [shape: bf16[128,384], index: 5, kind: input, shape index: {}]
  %s6 = inlined_call_operand.vmem [shape: f32[2,128,1], index: 6, kind: input, shape index: {}]
  %s7 = inlined_call_operand.hbm [shape: bf16[2,128,256], index: 7, kind: output, shape index: {}]
  %s8 = sld [smem:[#allocation0]]
  $region84: #{tpu_custom_call.1} parent=0
    _
  %s10 = ssub.s32 1, %s8
  %s11 = scalar_select 0, %s10, %s8
  %12 = sst [smem:[#allocation2]] %s4
  $region1: #{tpu_custom_call.1} parent=0
    #allocation3 [shape = 'u8[196608]{0}', space=vmem, size = 0x30000, scoped, tag = 'input window, operand 0']
    #allocation4 [shape = 'u8[131072]{0}', space=vmem, size = 0x20000, scoped, tag = 'output window, operand 0']
    #allocation5 [shape = 's32[2]{0}', space=sflag, size = 0x8, scoped, tag = 'scoped memory for tpu_custom_call.1']
    %13 = vsyncpa [#allocation5], 0
    %s14 = scalar_lea.sflag [#allocation5], 1
    %15 = vsyncpa %s14, 0
    loop: start=0, step=1, limit=4
    $region2: #{tpu_custom_call.1} parent=1 // loop_pre_header
      _
    $region3: #{tpu_custom_call.1} parent=1 // loop_header
      %s17 = sphi 0, %s21
      %p18 = scmp.ge.s32.totalorder %s17, 4
      %s24 = sphi 0, %s36
      %s25 = sphi 0, %s32
      %s26 = sphi 0, %s24
      %s27 = sphi 0, %s25
      %s28 = sphi 0, %s26
      %s29 = sphi 0, %s27
      %s41 = sphi 0, %s43
      %s44 = sphi 0, %s41
      %s45 = sphi 0, %s44
      %s61 = sphi 0, %s45
      %s65 = sphi 0, %s65
      %s67 = sphi 0, %s65
      %s68 = sphi 0, %s67
      %s82 = sphi 0, %s68
      %s86 = sphi 0, %s86
      %s88 = sphi 0, %s86
      %s89 = sphi 0, %s88
      %s103 = sphi 0, %s89
      %s107 = sphi 0, %s107
      %s109 = sphi 0, %s107
      %s110 = sphi 0, %s109
      %s124 = sphi 0, %s110
      %s128 = sphi 0, %s128
      %s130 = sphi 0, %s128
      %s131 = sphi 0, %s130
      %s145 = sphi 0, %s131
      %s149 = sphi 0, %s149
      %s151 = sphi 0, %s149
      %s152 = sphi 0, %s151
      %s166 = sphi 0, %s152
      %s170 = sphi 0, %s170
      %s172 = sphi 0, %s170
      %s173 = sphi 0, %s172
      %s187 = sphi 0, %s173
      %s195 = sphi 0, %s197
      %s198 = sphi 0, %s195
      %s199 = sphi 0, %s198
      %s215 = sphi 0, %s199
    $region4: #{tpu_custom_call.1} parent=1 // loop_header_branch
      %20 = sbr.rel (%p18) target = $region8
    $region5: #{tpu_custom_call.1} parent=1 // loop_body
      %s22 = ssub.s32 %s17, 1
      %s23 = ssub.s32 %s17, 2
      %s30 = sadd.s32 1, %s25
      %p31 = scmp.ge.s32.totalorder %s30, 1
      %s32 = scalar_select %p31, 0, %s30
      %s33 = sadd.s32 1, %s24
      %s34 = scalar_select %p31, %s33, %s24
      %p35 = scmp.ge.s32.totalorder %s34, 2
      %s36 = scalar_select %p35, 0, %s34
      %s37 = ssub.s32 %s24, %s36
      %s38 = ssub.s32 %s25, %s32
      %s39 = sor.u32 %s37, %s38
      %p40 = scmp.eq.s32.totalorder %s39, 0
      %s42 = sadd.s32 %s41, 1
      %s43 = scalar_select %p40, %s41, %s42
      %p46 = pneg %p40
      %p47 = scmp.eq.s32.totalorder %s17, 1
      %p48 = por %p46, %p47
      %p49 = scmp.ne.s32.totalorder %s41, %s44
      %p50 = scmp.eq.s32.totalorder %s17, 0
      %p51 = por %p49, %p50
      %p52 = scmp.ne.s32.totalorder %s41, %s44
      %p53 = scmp.eq.s32.totalorder %s22, 1
      %p54 = por %p52, %p53
      %p55 = scmp.ne.s32.totalorder %s44, %s45
      %p56 = scmp.eq.s32.totalorder %s22, 0
      %p57 = por %p55, %p56
      %p58 = scmp.ne.s32.totalorder %s44, %s45
      %p59 = scmp.eq.s32.totalorder %s23, 1
      %p60 = por %p58, %p59
      %p62 = scmp.ne.s32.totalorder %s45, %s61
      %p63 = scmp.eq.s32.totalorder %s23, 0
      %p64 = por %p62, %p63
      %s66 = sadd.s32 %s65, 1
      %p69 = scmp.eq.s32.totalorder %s17, 1
      %p70 = scmp.ne.s32.totalorder %s65, %s67
      %p71 = scmp.eq.s32.totalorder %s17, 0
      %p72 = por %p70, %p71
      %p73 = scmp.ne.s32.totalorder %s65, %s67
      %p74 = scmp.eq.s32.totalorder %s22, 1
      %p75 = por %p73, %p74
      %p76 = scmp.ne.s32.totalorder %s67, %s68
      %p77 = scmp.eq.s32.totalorder %s22, 0
      %p78 = por %p76, %p77
      %p79 = scmp.ne.s32.totalorder %s67, %s68
      %p80 = scmp.eq.s32.totalorder %s23, 1
      %p81 = por %p79, %p80
      %p83 = scmp.ne.s32.totalorder %s68, %s82
      %p84 = scmp.eq.s32.totalorder %s23, 0
      %p85 = por %p83, %p84
      %s87 = sadd.s32 %s86, 1
      %p90 = scmp.eq.s32.totalorder %s17, 1
      %p91 = scmp.ne.s32.totalorder %s86, %s88
      %p92 = scmp.eq.s32.totalorder %s17, 0
      %p93 = por %p91, %p92
      %p94 = scmp.ne.s32.totalorder %s86, %s88
      %p95 = scmp.eq.s32.totalorder %s22, 1
      %p96 = por %p94, %p95
      %p97 = scmp.ne.s32.totalorder %s88, %s89
      %p98 = scmp.eq.s32.totalorder %s22, 0
      %p99 = por %p97, %p98
      %p100 = scmp.ne.s32.totalorder %s88, %s89
      %p101 = scmp.eq.s32.totalorder %s23, 1
      %p102 = por %p100, %p101
      %p104 = scmp.ne.s32.totalorder %s89, %s103
      %p105 = scmp.eq.s32.totalorder %s23, 0
      %p106 = por %p104, %p105
      %s108 = sadd.s32 %s107, 1
      %p111 = scmp.eq.s32.totalorder %s17, 1
      %p112 = scmp.ne.s32.totalorder %s107, %s109
      %p113 = scmp.eq.s32.totalorder %s17, 0
      %p114 = por %p112, %p113
      %p115 = scmp.ne.s32.totalorder %s107, %s109
      %p116 = scmp.eq.s32.totalorder %s22, 1
      %p117 = por %p115, %p116
      %p118 = scmp.ne.s32.totalorder %s109, %s110
      %p119 = scmp.eq.s32.totalorder %s22, 0
      %p120 = por %p118, %p119
      %p121 = scmp.ne.s32.totalorder %s109, %s110
      %p122 = scmp.eq.s32.totalorder %s23, 1
      %p123 = por %p121, %p122
      %p125 = scmp.ne.s32.totalorder %s110, %s124
      %p126 = scmp.eq.s32.totalorder %s23, 0
      %p127 = por %p125, %p126
      %s129 = sadd.s32 %s128, 1
      %p132 = scmp.eq.s32.totalorder %s17, 1
      %p133 = scmp.ne.s32.totalorder %s128, %s130
      %p134 = scmp.eq.s32.totalorder %s17, 0
      %p135 = por %p133, %p134
      %p136 = scmp.ne.s32.totalorder %s128, %s130
      %p137 = scmp.eq.s32.totalorder %s22, 1
      %p138 = por %p136, %p137
      %p139 = scmp.ne.s32.totalorder %s130, %s131
      %p140 = scmp.eq.s32.totalorder %s22, 0
      %p141 = por %p139, %p140
      %p142 = scmp.ne.s32.totalorder %s130, %s131
      %p143 = scmp.eq.s32.totalorder %s23, 1
      %p144 = por %p142, %p143
      %p146 = scmp.ne.s32.totalorder %s131, %s145
      %p147 = scmp.eq.s32.totalorder %s23, 0
      %p148 = por %p146, %p147
      %s150 = sadd.s32 %s149, 1
      %p153 = scmp.eq.s32.totalorder %s17, 1
      %p154 = scmp.ne.s32.totalorder %s149, %s151
      %p155 = scmp.eq.s32.totalorder %s17, 0
      %p156 = por %p154, %p155
      %p157 = scmp.ne.s32.totalorder %s149, %s151
      %p158 = scmp.eq.s32.totalorder %s22, 1
      %p159 = por %p157, %p158
      %p160 = scmp.ne.s32.totalorder %s151, %s152
      %p161 = scmp.eq.s32.totalorder %s22, 0
      %p162 = por %p160, %p161
      %p163 = scmp.ne.s32.totalorder %s151, %s152
      %p164 = scmp.eq.s32.totalorder %s23, 1
      %p165 = por %p163, %p164
      %p167 = scmp.ne.s32.totalorder %s152, %s166
      %p168 = scmp.eq.s32.totalorder %s23, 0
      %p169 = por %p167, %p168
      %s171 = sadd.s32 %s170, 1
      %p174 = scmp.eq.s32.totalorder %s17, 1
      %p175 = scmp.ne.s32.totalorder %s170, %s172
      %p176 = scmp.eq.s32.totalorder %s17, 0
      %p177 = por %p175, %p176
      %p178 = scmp.ne.s32.totalorder %s170, %s172
      %p179 = scmp.eq.s32.totalorder %s22, 1
      %p180 = por %p178, %p179
      %p181 = scmp.ne.s32.totalorder %s172, %s173
      %p182 = scmp.eq.s32.totalorder %s22, 0
      %p183 = por %p181, %p182
      %p184 = scmp.ne.s32.totalorder %s172, %s173
      %p185 = scmp.eq.s32.totalorder %s23, 1
      %p186 = por %p184, %p185
      %p188 = scmp.ne.s32.totalorder %s173, %s187
      %p189 = scmp.eq.s32.totalorder %s23, 0
      %p190 = por %p188, %p189
      %s191 = ssub.s32 %s24, %s36
      %s192 = ssub.s32 %s25, %s32
      %s193 = sor.u32 %s191, %s192
      %p194 = scmp.eq.s32.totalorder %s193, 0
      %s196 = sadd.s32 %s195, 1
      %s197 = scalar_select %p194, %s195, %s196
      %p200 = pneg %p194
      %p201 = scmp.eq.s32.totalorder %s17, 1
      %p202 = por %p200, %p201
      %p203 = scmp.ne.s32.totalorder %s195, %s198
      %p204 = scmp.eq.s32.totalorder %s17, 0
      %p205 = por %p203, %p204
      %p206 = scmp.ne.s32.totalorder %s195, %s198
      %p207 = scmp.eq.s32.totalorder %s22, 1
      %p208 = por %p206, %p207
      %p209 = scmp.ne.s32.totalorder %s198, %s199
      %p210 = scmp.eq.s32.totalorder %s22, 0
      %p211 = por %p209, %p210
      %p212 = scmp.ne.s32.totalorder %s198, %s199
      %p213 = scmp.eq.s32.totalorder %s23, 1
      %p214 = por %p212, %p213
      %p216 = scmp.ne.s32.totalorder %s199, %s215
      %p217 = scmp.eq.s32.totalorder %s23, 0
      %p218 = por %p216, %p217
      %p219 = scmp.le.s32.totalorder 1, %s17
      %p220 = scmp.lt.s32.totalorder %s17, 3
      %p221 = pnand %p219, %p220
      %p222 = pneg %p221
      // Predicated region
      $region9: #{tpu_custom_call.1} parent=5 // pred_check
        _
      $region10: #{tpu_custom_call.1} parent=5 // pred_check_branch
        %224 = sbr.rel (%p221) target = $region12
      $region11: #{tpu_custom_call.1} parent=5 // pred_region
        %s225 = ssub.s32 %s17, 1
        // Predicated region
        $region13: #{tpu_custom_call.1} parent=11 // pred_check
          %p226 = pneg %p78
        $region14: #{tpu_custom_call.1} parent=11 // pred_check_branch
          %228 = sbr.rel (%p226) target = $region16
        $region15: #{tpu_custom_call.1} parent=11 // pred_region
          _
        $region16: #{tpu_custom_call.1} parent=11 // pred_fallthru
          _
        // Predicated region
        $region17: #{tpu_custom_call.1} parent=11 // pred_check
          %p229 = pneg %p99
        $region18: #{tpu_custom_call.1} parent=11 // pred_check_branch
          %231 = sbr.rel (%p229) target = $region20
        $region19: #{tpu_custom_call.1} parent=11 // pred_region
          _
        $region20: #{tpu_custom_call.1} parent=11 // pred_fallthru
          _
        // Predicated region
        $region21: #{tpu_custom_call.1} parent=11 // pred_check
          %p232 = pneg %p120
        $region22: #{tpu_custom_call.1} parent=11 // pred_check_branch
          %234 = sbr.rel (%p232) target = $region24
        $region23: #{tpu_custom_call.1} parent=11 // pred_region
          _
        $region24: #{tpu_custom_call.1} parent=11 // pred_fallthru
          _
        // Predicated region
        $region25: #{tpu_custom_call.1} parent=11 // pred_check
          %p235 = pneg %p141
        $region26: #{tpu_custom_call.1} parent=11 // pred_check_branch
          %237 = sbr.rel (%p235) target = $region28
        $region27: #{tpu_custom_call.1} parent=11 // pred_region
          _
        $region28: #{tpu_custom_call.1} parent=11 // pred_fallthru
          _
        // Predicated region
        $region29: #{tpu_custom_call.1} parent=11 // pred_check
          %p238 = pneg %p162
        $region30: #{tpu_custom_call.1} parent=11 // pred_check_branch
          %240 = sbr.rel (%p238) target = $region32
        $region31: #{tpu_custom_call.1} parent=11 // pred_region
          _
        $region32: #{tpu_custom_call.1} parent=11 // pred_fallthru
          _
        // Predicated region
        $region33: #{tpu_custom_call.1} parent=11 // pred_check
          %p241 = pneg %p183
        $region34: #{tpu_custom_call.1} parent=11 // pred_check_branch
          %243 = sbr.rel (%p241) target = $region36
        $region35: #{tpu_custom_call.1} parent=11 // pred_region
          _
        $region36: #{tpu_custom_call.1} parent=11 // pred_fallthru
          _
      $region12: #{tpu_custom_call.1} parent=5 // pred_fallthru
        _
      %p244 = scmp.lt.s32.totalorder %s17, 2
      // Predicated region
      $region37: #{tpu_custom_call.1} parent=5 // pred_check
        %p245 = pneg %p244
      $region38: #{tpu_custom_call.1} parent=5 // pred_check_branch
        %247 = sbr.rel (%p245) target = $region40
      $region39: #{tpu_custom_call.1} parent=5 // pred_region
        // Predicated region
        $region41: #{tpu_custom_call.1} parent=39 // pred_check
          %p248 = pneg %p51
        $region42: #{tpu_custom_call.1} parent=39 // pred_check_branch
          %250 = sbr.rel (%p248) target = $region44
        $region43: #{tpu_custom_call.1} parent=39 // pred_region
          %s251 = sand.u32 %s41, 1
          %s252 = sand.u32 %s41, 1
          %s253 = smul.addr %s252, 192
          %s254 = scalar_lea.vmem [#allocation3], %s253
          %s255 = smul.u32 2, %s25
          %s256 = smul.addr %s24, 8
          %s257 = sadd.s32 %s255, %s256
          %s258 = smul.addr %s257, 8
          %s259 = scalar_lea.vmem %s0, %s258
          // Predicated region
          $region45: #{tpu_custom_call.1} parent=43 // pred_check
            _
          $region46: #{tpu_custom_call.1} parent=43 // pred_check_branch
            %261 = sbr.rel (0) target = $region48
          $region47: #{tpu_custom_call.1} parent=43 // pred_region
            // Predicated region
            $region49: #{tpu_custom_call.1} parent=47 // pred_check
              _
            $region50: #{tpu_custom_call.1} parent=47 // pred_check_branch
              %263 = sbr.rel (0) target = $region52
            $region51: #{tpu_custom_call.1} parent=47 // pred_region
              loop: start=0, step=1, limit=1
              $region53: #{tpu_custom_call.1} parent=51 // loop_pre_header
                _
              $region54: #{tpu_custom_call.1} parent=51 // loop_header
                %s265 = sphi 0, %s269
                %p266 = scmp.ge.s32.totalorder %s265, 1
                %s270 = sphi %s259, %s259
                %s271 = sphi %s254, %s254
              $region55: #{tpu_custom_call.1} parent=51 // loop_header_branch
                %268 = sbr.rel (%p266) target = $region59
              $region56: #{tpu_custom_call.1} parent=51 // loop_body
                %v272 = vld [vmem:[%s270] sm:$0xff]
                %273 = vst [vmem:[%s271] sm:$0xff] %v272
                %v274 = vld [vmem:[%s270 + $0x8] sm:$0xff]
                %275 = vst [vmem:[%s271 + $0x8] sm:$0xff] %v274
                %v276 = vld [vmem:[%s270 + $0x10] sm:$0xff]
                %277 = vst [vmem:[%s271 + $0x10] sm:$0xff] %v276
                %v278 = vld [vmem:[%s270 + $0x18] sm:$0xff]
                %279 = vst [vmem:[%s271 + $0x18] sm:$0xff] %v278
                %v280 = vld [vmem:[%s270 + $0x20] sm:$0xff]
                %281 = vst [vmem:[%s271 + $0x20] sm:$0xff] %v280
                %v282 = vld [vmem:[%s270 + $0x28] sm:$0xff]
                %283 = vst [vmem:[%s271 + $0x28] sm:$0xff] %v282
                %v284 = vld [vmem:[%s270 + $0x30] sm:$0xff]
                %285 = vst [vmem:[%s271 + $0x30] sm:$0xff] %v284
                %v286 = vld [vmem:[%s270 + $0x38] sm:$0xff]
                %287 = vst [vmem:[%s271 + $0x38] sm:$0xff] %v286
                %v288 = vld [vmem:[%s270 + $0x80] sm:$0xff]
                %289 = vst [vmem:[%s271 + $0x40] sm:$0xff] %v288
                %v290 = vld [vmem:[%s270 + $0x88] sm:$0xff]
                %291 = vst [vmem:[%s271 + $0x48] sm:$0xff] %v290
                %v292 = vld [vmem:[%s270 + $0x90] sm:$0xff]
                %293 = vst [vmem:[%s271 + $0x50] sm:$0xff] %v292
                %v294 = vld [vmem:[%s270 + $0x98] sm:$0xff]
                %295 = vst [vmem:[%s271 + $0x58] sm:$0xff] %v294
                %v296 = vld [vmem:[%s270 + $0xa0] sm:$0xff]
                %297 = vst [vmem:[%s271 + $0x60] sm:$0xff] %v296
                %v298 = vld [vmem:[%s270 + $0xa8] sm:$0xff]
                %299 = vst [vmem:[%s271 + $0x68] sm:$0xff] %v298
                %v300 = vld [vmem:[%s270 + $0xb0] sm:$0xff]
                %301 = vst [vmem:[%s271 + $0x70] sm:$0xff] %v300
                %v302 = vld [vmem:[%s270 + $0xb8] sm:$0xff]
                %303 = vst [vmem:[%s271 + $0x78] sm:$0xff] %v302
                %v304 = vld [vmem:[%s270 + $0x100] sm:$0xff]
                %305 = vst [vmem:[%s271 + $0x80] sm:$0xff] %v304
                %v306 = vld [vmem:[%s270 + $0x108] sm:$0xff]
                %307 = vst [vmem:[%s271 + $0x88] sm:$0xff] %v306
                %v308 = vld [vmem:[%s270 + $0x110] sm:$0xff]
                %309 = vst [vmem:[%s271 + $0x90] sm:$0xff] %v308
                %v310 = vld [vmem:[%s270 + $0x118] sm:$0xff]
                %311 = vst [vmem:[%s271 + $0x98] sm:$0xff] %v310
                %v312 = vld [vmem:[%s270 + $0x120] sm:$0xff]
                %313 = vst [vmem:[%s271 + $0xa0] sm:$0xff] %v312
                %v314 = vld [vmem:[%s270 + $0x128] sm:$0xff]
                %315 = vst [vmem:[%s271 + $0xa8] sm:$0xff] %v314
                %v316 = vld [vmem:[%s270 + $0x130] sm:$0xff]
                %317 = vst [vmem:[%s271 + $0xb0] sm:$0xff] %v316
                %v318 = vld [vmem:[%s270 + $0x138] sm:$0xff]
                %319 = vst [vmem:[%s271 + $0xb8] sm:$0xff] %v318
              $region57: #{tpu_custom_call.1} parent=51 // loop_footer
                %s269 = sadd.s32 1, %s265
              $region58: #{tpu_custom_call.1} parent=51 // loop_footer_branch
                %264 = sbr.rel target = $region54
              $region59: #{tpu_custom_call.1} parent=51 // loop_exit
                _
            $region52: #{tpu_custom_call.1} parent=47 // pred_fallthru
              _
            // Predicated region
            $region60: #{tpu_custom_call.1} parent=47 // pred_check
              _
            $region61: #{tpu_custom_call.1} parent=47 // pred_check_branch
              %321 = sbr.rel target = $region63
            $region62: #{tpu_custom_call.1} parent=47 // pred_region
              _
            $region63: #{tpu_custom_call.1} parent=47 // pred_fallthru
              _
          $region48: #{tpu_custom_call.1} parent=43 // pred_fallthru
            _
          %322 = vnop
        $region44: #{tpu_custom_call.1} parent=39 // pred_fallthru
          _
      $region40: #{tpu_custom_call.1} parent=5 // pred_fallthru
        _
      %p323 = scmp.le.s32.totalorder 1, %s17
      %p324 = scmp.lt.s32.totalorder %s17, 3
      %p325 = pnand %p323, %p324
      %p326 = pneg %p325
      // Predicated region
      $region64: #{tpu_custom_call.1} parent=5 // pred_check
        _
      $region65: #{tpu_custom_call.1} parent=5 // pred_check_branch
        %328 = sbr.rel (%p325) target = $region67
      $region66: #{tpu_custom_call.1} parent=5 // pred_region
        %s329 = ssub.s32 %s17, 1
        %s330 = sand.u32 %s44, 1
        %s331 = sand.u32 %s44, 1
        %s332 = smul.addr %s331, 192
        %s333 = scalar_lea.vmem [#allocation3], %s332
        // Predicated region
        $region68: #{tpu_custom_call.1} parent=66 // pred_check
          %p334 = pneg %p57
        $region69: #{tpu_custom_call.1} parent=66 // pred_check_branch
          %336 = sbr.rel (%p334) target = $region71
        $region70: #{tpu_custom_call.1} parent=66 // pred_region
          _
        $region71: #{tpu_custom_call.1} parent=66 // pred_fallthru
          _
        %s337 = sand.u32 %s44, 1
        %s338 = sand.u32 %s44, 1
        %s339 = smul.addr %s338, 192
        %s340 = scalar_lea.vmem [#allocation3], %s339
        %p341 = pneg %p57
        %p342 = pneg %p54
        %p343 = pneg %p78
        %p344 = pneg %p75
        %p345 = pneg %p99
        %p346 = pneg %p96
        %p347 = pneg %p120
        %p348 = pneg %p117
        %p349 = pneg %p141
        %p350 = pneg %p138
        %p351 = pneg %p162
        %p352 = pneg %p159
        %p353 = pneg %p183
        %p354 = pneg %p180
        %p355 = pneg %p211
        %p356 = pneg %p208
        %s357 = sand.u32 %s198, 1
        %s358 = scalar_lea.sflag [#allocation5], %s357
        %s359 = sand.u32 %s198, 1
        %s360 = smul.addr %s359, 128
        %s361 = scalar_lea.vmem [#allocation4], %s360
        %s362 = smul.u32 2, %s27
        %s363 = smul.u32 2, %s27
        %v365 = vld [vmem:[%s333] sm:$0xff]
        %v366 = vld [vmem:[%s333 + $0x8] sm:$0xff]
        %v367 = vld [vmem:[%s333 + $0x10] sm:$0xff]
        %v368 = vld [vmem:[%s333 + $0x18] sm:$0xff]
        %v369 = vld [vmem:[%s333 + $0x20] sm:$0xff]
        %v370 = vld [vmem:[%s333 + $0x28] sm:$0xff]
        %v371 = vld [vmem:[%s333 + $0x30] sm:$0xff]
        %v372 = vld [vmem:[%s333 + $0x38] sm:$0xff]
        %v373 = vpack.c.bf16 %v367, %v365
        %v374 = vpack.c.bf16 %v368, %v366
        %v375 = vpack.c.bf16 %v371, %v369
        %v376 = vpack.c.bf16 %v372, %v370
        %v377 = vld [vmem:[%s1] sm:$0xf]
        %v378 = vld [vmem:[%s1 + $0x4] sm:$0xf]
        %v379 = vld [vmem:[%s1 + $0x8] sm:$0xf]
        %v380 = vld [vmem:[%s1 + $0xc] sm:$0xf]
        %v381 = vld [vmem:[%s1 + $0x10] sm:$0xf]
        %v382 = vld [vmem:[%s1 + $0x14] sm:$0xf]
        %v383 = vld [vmem:[%s1 + $0x18] sm:$0xf]
        %v384 = vld [vmem:[%s1 + $0x1c] sm:$0xf]
        %v385 = vld [vmem:[%s1 + $0x20] sm:$0xf]
        %v386 = vld [vmem:[%s1 + $0x24] sm:$0xf]
        %v387 = vld [vmem:[%s1 + $0x28] sm:$0xf]
        %v388 = vld [vmem:[%s1 + $0x2c] sm:$0xf]
        %v389 = vld [vmem:[%s1 + $0x30] sm:$0xf]
        %v390 = vld [vmem:[%s1 + $0x34] sm:$0xf]
        %v391 = vld [vmem:[%s1 + $0x38] sm:$0xf]
        %v392 = vld [vmem:[%s1 + $0x3c] sm:$0xf]
        %v393 = vld [vmem:[%s2] sm:$0xff]
        %v394 = vld [vmem:[%s2 + $0x8] sm:$0xff]
        %v395 = vld [vmem:[%s2 + $0x10] sm:$0xff]
        %v396 = vld [vmem:[%s2 + $0x18] sm:$0xff]
        %v397 = vld [vmem:[%s2 + $0x20] sm:$0xff]
        %v398 = vld [vmem:[%s2 + $0x28] sm:$0xff]
        %v399 = vld [vmem:[%s2 + $0x30] sm:$0xff]
        %v400 = vld [vmem:[%s2 + $0x38] sm:$0xff]
        %v401 = vld [vmem:[%s2 + $0x40] sm:$0xff]
        %v402 = vld [vmem:[%s2 + $0x48] sm:$0xff]
        %v403 = vld [vmem:[%s2 + $0x50] sm:$0xff]
        %v404 = vld [vmem:[%s2 + $0x58] sm:$0xff]
        %v405 = vld [vmem:[%s2 + $0x60] sm:$0xff]
        %v406 = vld [vmem:[%s2 + $0x68] sm:$0xff]
        %v407 = vld [vmem:[%s2 + $0x70] sm:$0xff]
        %v408 = vld [vmem:[%s2 + $0x78] sm:$0xff]
        %410 = vset.pattern.permute.xlu0 0
        %411 = vperm.xlu0 %410, %v393
        %v412 = vpop.permute.xlu0 %411
        %415 = vset.pattern.permute.xlu0 0
        %416 = vperm.xlu0 %415, %v394
        %v417 = vpop.permute.xlu0 %416
        %420 = vset.pattern.permute.xlu0 0
        %421 = vperm.xlu0 %420, %v395
        %v422 = vpop.permute.xlu0 %421
        %425 = vset.pattern.permute.xlu0 0
        %426 = vperm.xlu0 %425, %v396
        %v427 = vpop.permute.xlu0 %426
        %430 = vset.pattern.permute.xlu0 0
        %431 = vperm.xlu0 %430, %v397
        %v432 = vpop.permute.xlu0 %431
        %435 = vset.pattern.permute.xlu0 0
        %436 = vperm.xlu0 %435, %v398
        %v437 = vpop.permute.xlu0 %436
        %440 = vset.pattern.permute.xlu0 0
        %441 = vperm.xlu0 %440, %v399
        %v442 = vpop.permute.xlu0 %441
        %445 = vset.pattern.permute.xlu0 0
        %446 = vperm.xlu0 %445, %v400
        %v447 = vpop.permute.xlu0 %446
        %450 = vset.pattern.permute.xlu0 0
        %451 = vperm.xlu0 %450, %v401
        %v452 = vpop.permute.xlu0 %451
        %455 = vset.pattern.permute.xlu0 0
        %456 = vperm.xlu0 %455, %v402
        %v457 = vpop.permute.xlu0 %456
        %460 = vset.pattern.permute.xlu0 0
        %461 = vperm.xlu0 %460, %v403
        %v462 = vpop.permute.xlu0 %461
        %465 = vset.pattern.permute.xlu0 0
        %466 = vperm.xlu0 %465, %v404
        %v467 = vpop.permute.xlu0 %466
        %470 = vset.pattern.permute.xlu0 0
        %471 = vperm.xlu0 %470, %v405
        %v472 = vpop.permute.xlu0 %471
        %475 = vset.pattern.permute.xlu0 0
        %476 = vperm.xlu0 %475, %v406
        %v477 = vpop.permute.xlu0 %476
        %480 = vset.pattern.permute.xlu0 0
        %481 = vperm.xlu0 %480, %v407
        %v482 = vpop.permute.xlu0 %481
        %485 = vset.pattern.permute.xlu0 0
        %486 = vperm.xlu0 %485, %v408
        %v487 = vpop.permute.xlu0 %486
        %v505 = vunpack.c.l.b16 %v377
        %v506 = vunpack.c.l.b16 %v378
        %v507 = vunpack.c.l.b16 %v379
        %v508 = vunpack.c.l.b16 %v380
        %v509 = vunpack.c.l.b16 %v381
        %v510 = vunpack.c.l.b16 %v382
        %v511 = vunpack.c.l.b16 %v383
        %v512 = vunpack.c.l.b16 %v384
        %v513 = vunpack.c.l.b16 %v385
        %v514 = vunpack.c.l.b16 %v386
        %v515 = vunpack.c.l.b16 %v387
        %v516 = vunpack.c.l.b16 %v388
        %v517 = vunpack.c.l.b16 %v389
        %v518 = vunpack.c.l.b16 %v390
        %v519 = vunpack.c.l.b16 %v391
        %v520 = vunpack.c.l.b16 %v392
        %v521 = vpack.c.b16 %v506, %v505
        %v522 = vpack.c.b16 %v508, %v507
        %v523 = vpack.c.b16 %v510, %v509
        %v524 = vpack.c.b16 %v512, %v511
        %v525 = vpack.c.b16 %v514, %v513
        %v526 = vpack.c.b16 %v516, %v515
        %v527 = vpack.c.b16 %v518, %v517
        %v528 = vpack.c.b16 %v520, %v519
        %vm529 = vcmask 261120
        %v531 = vsel %vm529, %v521, 0
        %v534 = vsel %vm529, %v522, 0
        %v537 = vsel %vm529, %v523, 0
        %v540 = vsel %vm529, %v524, 0
        %v543 = vsel %vm529, %v525, 0
        %v546 = vsel %vm529, %v526, 0
        %v549 = vsel %vm529, %v527, 0
        %v552 = vsel %vm529, %v528, 0
        %554 = vmatprep.subr.bf16.mxu0 0
        %555 = vmatpush1.bf16.msra.mxu0 0
        %556 = vmatprep.subr.bf16.mxu0 0
        %557 = vmatpush1.bf16.msra.mxu0 0
        %558 = vmatprep.subr.bf16.mxu0 0
        %559 = vmatpush1.bf16.msra.mxu0 0
        %560 = vmatprep.subr.bf16.mxu0 0
        %561 = vmatpush1.bf16.msra.mxu0 0
        %562 = vmatprep.subr.bf16.mxu0 0
        %563 = vmatpush1.bf16.msra.mxu0 0
        %564 = vmatprep.subr.bf16.mxu0 0
        %565 = vmatpush1.bf16.msra.mxu0 0
        %566 = vmatprep.subr.bf16.mxu0 %v376
        %567 = vmatpush1.bf16.msra.mxu0 %v375
        %568 = vmatprep.subr.bf16.mxu0 %v374
        %569 = vmatpush1.bf16.msra.mxu0 %v373
        %570 = vmatprep.subr.bf16.mxu0 0
        %571 = vmatpush2.bf16.msra.mxu0 0
        %572 = vmatprep.subr.bf16.mxu0 0
        %573 = vmatpush2.bf16.msra.mxu0 0
        %574 = vmatprep.subr.bf16.mxu0 0
        %575 = vmatpush2.bf16.msra.mxu0 0
        %576 = vmatprep.subr.bf16.mxu0 0
        %577 = vmatpush2.bf16.msra.mxu0 0
        %578 = vmatprep.subr.bf16.mxu0 0
        %579 = vmatpush2.bf16.msra.mxu0 0
        %580 = vmatprep.subr.bf16.mxu0 0
        %581 = vmatpush2.bf16.msra.mxu0 0
        %582 = vmatprep.subr.bf16.mxu0 0
        %583 = vmatpush2.bf16.msra.mxu0 0
        %584 = vmatprep.subr.bf16.mxu0 0
        %585 = vmatpush2.bf16.msra.mxu0 0
        %586 = vmatprep.mubr.bf16.mxu0 0
        %587 = vmatmul.mubr.bf16.gmra.mxu0 %v531
        %v588 = vpop.f32.mrf.mxu0
        %v589 = vadd.f32 %v412, %v588
        %v590 = vpop.f32.mrf.mxu0
        %v591 = vadd.f32 %v412, %v590
        %v592 = vpop.f32.mrf.mxu0
        %v593 = vadd.f32 %v417, %v592
        %v594 = vpop.f32.mrf.mxu0
        %v595 = vadd.f32 %v417, %v594
        %596 = vmatprep.mubr.bf16.mxu0 0
        %597 = vmatmul.mubr.bf16.gmra.mxu0 %v534
        %v598 = vpop.f32.mrf.mxu0
        %v599 = vadd.f32 %v422, %v598
        %v600 = vpop.f32.mrf.mxu0
        %v601 = vadd.f32 %v422, %v600
        %v602 = vpop.f32.mrf.mxu0
        %v603 = vadd.f32 %v427, %v602
        %v604 = vpop.f32.mrf.mxu0
        %v605 = vadd.f32 %v427, %v604
        %606 = vmatprep.mubr.bf16.mxu0 0
        %607 = vmatmul.mubr.bf16.gmra.mxu0 %v537
        %v608 = vpop.f32.mrf.mxu0
        %v609 = vadd.f32 %v432, %v608
        %v610 = vpop.f32.mrf.mxu0
        %v611 = vadd.f32 %v432, %v610
        %v612 = vpop.f32.mrf.mxu0
        %v613 = vadd.f32 %v437, %v612
        %v614 = vpop.f32.mrf.mxu0
        %v615 = vadd.f32 %v437, %v614
        %616 = vmatprep.mubr.bf16.mxu0 0
        %617 = vmatmul.mubr.bf16.gmra.mxu0 %v540
        %v618 = vpop.f32.mrf.mxu0
        %v619 = vadd.f32 %v442, %v618
        %v620 = vpop.f32.mrf.mxu0
        %v621 = vadd.f32 %v442, %v620
        %v622 = vpop.f32.mrf.mxu0
        %v623 = vadd.f32 %v447, %v622
        %v624 = vpop.f32.mrf.mxu0
        %v625 = vadd.f32 %v447, %v624
        %626 = vmatprep.mubr.bf16.mxu0 0
        %627 = vmatmul.mubr.bf16.gmra.mxu0 %v543
        %v628 = vpop.f32.mrf.mxu0
        %v629 = vadd.f32 %v452, %v628
        %v630 = vpop.f32.mrf.mxu0
        %v631 = vadd.f32 %v452, %v630
        %v632 = vpop.f32.mrf.mxu0
        %v633 = vadd.f32 %v457, %v632
        %v634 = vpop.f32.mrf.mxu0
        %v635 = vadd.f32 %v457, %v634
        %636 = vmatprep.mubr.bf16.mxu0 0
        %637 = vmatmul.mubr.bf16.gmra.mxu0 %v546
        %v638 = vpop.f32.mrf.mxu0
        %v639 = vadd.f32 %v462, %v638
        %v640 = vpop.f32.mrf.mxu0
        %v641 = vadd.f32 %v462, %v640
        %v642 = vpop.f32.mrf.mxu0
        %v643 = vadd.f32 %v467, %v642
        %v644 = vpop.f32.mrf.mxu0
        %v645 = vadd.f32 %v467, %v644
        %646 = vmatprep.mubr.bf16.mxu0 0
        %647 = vmatmul.mubr.bf16.gmra.mxu0 %v549
        %v648 = vpop.f32.mrf.mxu0
        %v649 = vadd.f32 %v472, %v648
        %v650 = vpop.f32.mrf.mxu0
        %v651 = vadd.f32 %v472, %v650
        %v652 = vpop.f32.mrf.mxu0
        %v653 = vadd.f32 %v477, %v652
        %v654 = vpop.f32.mrf.mxu0
        %v655 = vadd.f32 %v477, %v654
        %656 = vmatprep.mubr.bf16.mxu0 0
        %657 = vmatmul.mubr.bf16.gmra.mxu0 %v552
        %v658 = vpop.f32.mrf.mxu0
        %v659 = vadd.f32 %v482, %v658
        %v660 = vpop.f32.mrf.mxu0
        %v661 = vadd.f32 %v482, %v660
        %v662 = vpop.f32.mrf.mxu0
        %v663 = vadd.f32 %v487, %v662
        %v664 = vpop.f32.mrf.mxu0
        %v665 = vadd.f32 %v487, %v664
        %666 = vdwg.mxu0
        %v667 = vmax.f32 %v589, 0.0
        %v668 = vmax.f32 %v591, 0.0
        %v669 = vmax.f32 %v593, 0.0
        %v670 = vmax.f32 %v595, 0.0
        %v671 = vmax.f32 %v599, 0.0
        %v672 = vmax.f32 %v601, 0.0
        %v673 = vmax.f32 %v603, 0.0
        %v674 = vmax.f32 %v605, 0.0
        %v675 = vmax.f32 %v609, 0.0
        %v676 = vmax.f32 %v611, 0.0
        %v677 = vmax.f32 %v613, 0.0
        %v678 = vmax.f32 %v615, 0.0
        %v679 = vmax.f32 %v619, 0.0
        %v680 = vmax.f32 %v621, 0.0
        %v681 = vmax.f32 %v623, 0.0
        %v682 = vmax.f32 %v625, 0.0
        %v683 = vmax.f32 %v629, 0.0
        %v684 = vmax.f32 %v631, 0.0
        %v685 = vmax.f32 %v633, 0.0
        %v686 = vmax.f32 %v635, 0.0
        %v687 = vmax.f32 %v639, 0.0
        %v688 = vmax.f32 %v641, 0.0
        %v689 = vmax.f32 %v643, 0.0
        %v690 = vmax.f32 %v645, 0.0
        %v691 = vmax.f32 %v649, 0.0
        %v692 = vmax.f32 %v651, 0.0
        %v693 = vmax.f32 %v653, 0.0
        %v694 = vmax.f32 %v655, 0.0
        %v695 = vmax.f32 %v659, 0.0
        %v696 = vmax.f32 %v661, 0.0
        %v697 = vmax.f32 %v663, 0.0
        %v698 = vmax.f32 %v665, 0.0
        %v699 = vld [vmem:[%s3] sm:$0xff]
        %v700 = vld [vmem:[%s3 + $0x8] sm:$0xff]
        %v701 = vld [vmem:[%s3 + $0x10] sm:$0xff]
        %v702 = vld [vmem:[%s3 + $0x18] sm:$0xff]
        %v703 = vld [vmem:[%s3 + $0x20] sm:$0xff]
        %v704 = vld [vmem:[%s3 + $0x28] sm:$0xff]
        %v705 = vld [vmem:[%s3 + $0x30] sm:$0xff]
        %v706 = vld [vmem:[%s3 + $0x38] sm:$0xff]
        %v707 = vld [vmem:[%s3 + $0x40] sm:$0xff]
        %v708 = vld [vmem:[%s3 + $0x48] sm:$0xff]
        %v709 = vld [vmem:[%s3 + $0x50] sm:$0xff]
        %v710 = vld [vmem:[%s3 + $0x58] sm:$0xff]
        %v711 = vld [vmem:[%s3 + $0x60] sm:$0xff]
        %v712 = vld [vmem:[%s3 + $0x68] sm:$0xff]
        %v713 = vld [vmem:[%s3 + $0x70] sm:$0xff]
        %v714 = vld [vmem:[%s3 + $0x78] sm:$0xff]
        %716 = vset.pattern.permute.xlu0 0
        %717 = vperm.xlu0 %716, %v699
        %v718 = vpop.permute.xlu0 %717
        %721 = vset.pattern.permute.xlu0 0
        %722 = vperm.xlu0 %721, %v700
        %v723 = vpop.permute.xlu0 %722
        %726 = vset.pattern.permute.xlu0 0
        %727 = vperm.xlu0 %726, %v701
        %v728 = vpop.permute.xlu0 %727
        %731 = vset.pattern.permute.xlu0 0
        %732 = vperm.xlu0 %731, %v702
        %v733 = vpop.permute.xlu0 %732
        %736 = vset.pattern.permute.xlu0 0
        %737 = vperm.xlu0 %736, %v703
        %v738 = vpop.permute.xlu0 %737
        %741 = vset.pattern.permute.xlu0 0
        %742 = vperm.xlu0 %741, %v704
        %v743 = vpop.permute.xlu0 %742
        %746 = vset.pattern.permute.xlu0 0
        %747 = vperm.xlu0 %746, %v705
        %v748 = vpop.permute.xlu0 %747
        %751 = vset.pattern.permute.xlu0 0
        %752 = vperm.xlu0 %751, %v706
        %v753 = vpop.permute.xlu0 %752
        %756 = vset.pattern.permute.xlu0 0
        %757 = vperm.xlu0 %756, %v707
        %v758 = vpop.permute.xlu0 %757
        %761 = vset.pattern.permute.xlu0 0
        %762 = vperm.xlu0 %761, %v708
        %v763 = vpop.permute.xlu0 %762
        %766 = vset.pattern.permute.xlu0 0
        %767 = vperm.xlu0 %766, %v709
        %v768 = vpop.permute.xlu0 %767
        %771 = vset.pattern.permute.xlu0 0
        %772 = vperm.xlu0 %771, %v710
        %v773 = vpop.permute.xlu0 %772
        %776 = vset.pattern.permute.xlu0 0
        %777 = vperm.xlu0 %776, %v711
        %v778 = vpop.permute.xlu0 %777
        %781 = vset.pattern.permute.xlu0 0
        %782 = vperm.xlu0 %781, %v712
        %v783 = vpop.permute.xlu0 %782
        %786 = vset.pattern.permute.xlu0 0
        %787 = vperm.xlu0 %786, %v713
        %v788 = vpop.permute.xlu0 %787
        %791 = vset.pattern.permute.xlu0 0
        %792 = vperm.xlu0 %791, %v714
        %v793 = vpop.permute.xlu0 %792
        %v795 = vmul.f32 %v667, %v718
        %v796 = vmul.f32 %v668, %v718
        %v797 = vmul.f32 %v669, %v723
        %v798 = vmul.f32 %v670, %v723
        %v799 = vmul.f32 %v671, %v728
        %v800 = vmul.f32 %v672, %v728
        %v801 = vmul.f32 %v673, %v733
        %v802 = vmul.f32 %v674, %v733
        %v803 = vmul.f32 %v675, %v738
        %v804 = vmul.f32 %v676, %v738
        %v805 = vmul.f32 %v677, %v743
        %v806 = vmul.f32 %v678, %v743
        %v807 = vmul.f32 %v679, %v748
        %v808 = vmul.f32 %v680, %v748
        %v809 = vmul.f32 %v681, %v753
        %v810 = vmul.f32 %v682, %v753
        %v811 = vmul.f32 %v683, %v758
        %v812 = vmul.f32 %v684, %v758
        %v813 = vmul.f32 %v685, %v763
        %v814 = vmul.f32 %v686, %v763
        %v815 = vmul.f32 %v687, %v768
        %v816 = vmul.f32 %v688, %v768
        %v817 = vmul.f32 %v689, %v773
        %v818 = vmul.f32 %v690, %v773
        %v819 = vmul.f32 %v691, %v778
        %v820 = vmul.f32 %v692, %v778
        %v821 = vmul.f32 %v693, %v783
        %v822 = vmul.f32 %v694, %v783
        %v823 = vmul.f32 %v695, %v788
        %v824 = vmul.f32 %v696, %v788
        %v825 = vmul.f32 %v697, %v793
        %v826 = vmul.f32 %v698, %v793
        %v827 = vadd.f32 %v795, %v797
        %v828 = vadd.f32 %v827, %v799
        %v829 = vadd.f32 %v828, %v801
        %v830 = vadd.f32 %v829, %v803
        %v831 = vadd.f32 %v830, %v805
        %v832 = vadd.f32 %v831, %v807
        %v833 = vadd.f32 %v832, %v809
        %v834 = vadd.f32 %v833, %v811
        %v835 = vadd.f32 %v834, %v813
        %v836 = vadd.f32 %v835, %v815
        %v837 = vadd.f32 %v836, %v817
        %v838 = vadd.f32 %v837, %v819
        %v839 = vadd.f32 %v838, %v821
        %v840 = vadd.f32 %v839, %v823
        %v841 = vadd.f32 %v840, %v825
        %v842 = vrot.slane %v841, 4
        %v843 = vadd.f32 %v841, %v842
        %v844 = vrot.slane %v843, 2
        %v845 = vadd.f32 %v843, %v844
        %v846 = vrot.slane %v845, 1
        %v847 = vadd.f32 %v845, %v846
        %v848 = vadd.f32 %v796, %v798
        %v849 = vadd.f32 %v848, %v800
        %v850 = vadd.f32 %v849, %v802
        %v851 = vadd.f32 %v850, %v804
        %v852 = vadd.f32 %v851, %v806
        %v853 = vadd.f32 %v852, %v808
        %v854 = vadd.f32 %v853, %v810
        %v855 = vadd.f32 %v854, %v812
        %v856 = vadd.f32 %v855, %v814
        %v857 = vadd.f32 %v856, %v816
        %v858 = vadd.f32 %v857, %v818
        %v859 = vadd.f32 %v858, %v820
        %v860 = vadd.f32 %v859, %v822
        %v861 = vadd.f32 %v860, %v824
        %v862 = vadd.f32 %v861, %v826
        %v863 = vrot.slane %v862, 4
        %v864 = vadd.f32 %v862, %v863
        %v865 = vrot.slane %v864, 2
        %v866 = vadd.f32 %v864, %v865
        %v867 = vrot.slane %v866, 1
        %v868 = vadd.f32 %v866, %v867
        %v869 = vadd.f32 %v847, 0.0
        %v870 = vadd.f32 %v868, 0.0
        %v871 = vpack.c.bf16 %v669, %v667
        %v872 = vpack.c.bf16 %v670, %v668
        %v873 = vpack.c.bf16 %v673, %v671
        %v874 = vpack.c.bf16 %v674, %v672
        %v875 = vpack.c.bf16 %v677, %v675
        %v876 = vpack.c.bf16 %v678, %v676
        %v877 = vpack.c.bf16 %v681, %v679
        %v878 = vpack.c.bf16 %v682, %v680
        %v879 = vpack.c.bf16 %v685, %v683
        %v880 = vpack.c.bf16 %v686, %v684
        %v881 = vpack.c.bf16 %v689, %v687
        %v882 = vpack.c.bf16 %v690, %v688
        %v883 = vpack.c.bf16 %v693, %v691
        %v884 = vpack.c.bf16 %v694, %v692
        %v885 = vpack.c.bf16 %v697, %v695
        %v886 = vpack.c.bf16 %v698, %v696
        %s887 = scalar_lea.vmem %s333, 64 [#allocation3]
        %v888 = vld [vmem:[%s887] sm:$0xff]
        %v889 = vld [vmem:[%s887 + $0x8] sm:$0xff]
        %v890 = vld [vmem:[%s887 + $0x10] sm:$0xff]
        %v891 = vld [vmem:[%s887 + $0x18] sm:$0xff]
        %v892 = vld [vmem:[%s887 + $0x20] sm:$0xff]
        %v893 = vld [vmem:[%s887 + $0x28] sm:$0xff]
        %v894 = vld [vmem:[%s887 + $0x30] sm:$0xff]
        %v895 = vld [vmem:[%s887 + $0x38] sm:$0xff]
        %v896 = vpack.c.bf16 %v890, %v888
        %v897 = vpack.c.bf16 %v891, %v889
        %v898 = vpack.c.bf16 %v894, %v892
        %v899 = vpack.c.bf16 %v895, %v893
        %s900 = scalar_lea.vmem %s1, 64
        %v901 = vld [vmem:[%s900] sm:$0xf]
        %v902 = vld [vmem:[%s900 + $0x4] sm:$0xf]
        %v903 = vld [vmem:[%s900 + $0x8] sm:$0xf]
        %v904 = vld [vmem:[%s900 + $0xc] sm:$0xf]
        %v905 = vld [vmem:[%s900 + $0x10] sm:$0xf]
        %v906 = vld [vmem:[%s900 + $0x14] sm:$0xf]
        %v907 = vld [vmem:[%s900 + $0x18] sm:$0xf]
        %v908 = vld [vmem:[%s900 + $0x1c] sm:$0xf]
        %v909 = vld [vmem:[%s900 + $0x20] sm:$0xf]
        %v910 = vld [vmem:[%s900 + $0x24] sm:$0xf]
        %v911 = vld [vmem:[%s900 + $0x28] sm:$0xf]
        %v912 = vld [vmem:[%s900 + $0x2c] sm:$0xf]
        %v913 = vld [vmem:[%s900 + $0x30] sm:$0xf]
        %v914 = vld [vmem:[%s900 + $0x34] sm:$0xf]
        %v915 = vld [vmem:[%s900 + $0x38] sm:$0xf]
        %v916 = vld [vmem:[%s900 + $0x3c] sm:$0xf]
        %s917 = scalar_lea.vmem %s2, 128
        %v918 = vld [vmem:[%s917] sm:$0xff]
        %v919 = vld [vmem:[%s917 + $0x8] sm:$0xff]
        %v920 = vld [vmem:[%s917 + $0x10] sm:$0xff]
        %v921 = vld [vmem:[%s917 + $0x18] sm:$0xff]
        %v922 = vld [vmem:[%s917 + $0x20] sm:$0xff]
        %v923 = vld [vmem:[%s917 + $0x28] sm:$0xff]
        %v924 = vld [vmem:[%s917 + $0x30] sm:$0xff]
        %v925 = vld [vmem:[%s917 + $0x38] sm:$0xff]
        %v926 = vld [vmem:[%s917 + $0x40] sm:$0xff]
        %v927 = vld [vmem:[%s917 + $0x48] sm:$0xff]
        %v928 = vld [vmem:[%s917 + $0x50] sm:$0xff]
        %v929 = vld [vmem:[%s917 + $0x58] sm:$0xff]
        %v930 = vld [vmem:[%s917 + $0x60] sm:$0xff]
        %v931 = vld [vmem:[%s917 + $0x68] sm:$0xff]
        %v932 = vld [vmem:[%s917 + $0x70] sm:$0xff]
        %v933 = vld [vmem:[%s917 + $0x78] sm:$0xff]
        %935 = vset.pattern.permute.xlu0 0
        %936 = vperm.xlu0 %935, %v918
        %v937 = vpop.permute.xlu0 %936
        %940 = vset.pattern.permute.xlu0 0
        %941 = vperm.xlu0 %940, %v919
        %v942 = vpop.permute.xlu0 %941
        %945 = vset.pattern.permute.xlu0 0
        %946 = vperm.xlu0 %945, %v920
        %v947 = vpop.permute.xlu0 %946
        %950 = vset.pattern.permute.xlu0 0
        %951 = vperm.xlu0 %950, %v921
        %v952 = vpop.permute.xlu0 %951
        %955 = vset.pattern.permute.xlu0 0
        %956 = vperm.xlu0 %955, %v922
        %v957 = vpop.permute.xlu0 %956
        %960 = vset.pattern.permute.xlu0 0
        %961 = vperm.xlu0 %960, %v923
        %v962 = vpop.permute.xlu0 %961
        %965 = vset.pattern.permute.xlu0 0
        %966 = vperm.xlu0 %965, %v924
        %v967 = vpop.permute.xlu0 %966
        %970 = vset.pattern.permute.xlu0 0
        %971 = vperm.xlu0 %970, %v925
        %v972 = vpop.permute.xlu0 %971
        %975 = vset.pattern.permute.xlu0 0
        %976 = vperm.xlu0 %975, %v926
        %v977 = vpop.permute.xlu0 %976
        %980 = vset.pattern.permute.xlu0 0
        %981 = vperm.xlu0 %980, %v927
        %v982 = vpop.permute.xlu0 %981
        %985 = vset.pattern.permute.xlu0 0
        %986 = vperm.xlu0 %985, %v928
        %v987 = vpop.permute.xlu0 %986
        %990 = vset.pattern.permute.xlu0 0
        %991 = vperm.xlu0 %990, %v929
        %v992 = vpop.permute.xlu0 %991
        %995 = vset.pattern.permute.xlu0 0
        %996 = vperm.xlu0 %995, %v930
        %v997 = vpop.permute.xlu0 %996
        %1000 = vset.pattern.permute.xlu0 0
        %1001 = vperm.xlu0 %1000, %v931
        %v1002 = vpop.permute.xlu0 %1001
        %1005 = vset.pattern.permute.xlu0 0
        %1006 = vperm.xlu0 %1005, %v932
        %v1007 = vpop.permute.xlu0 %1006
        %1010 = vset.pattern.permute.xlu0 0
        %1011 = vperm.xlu0 %1010, %v933
        %v1012 = vpop.permute.xlu0 %1011
        %v1030 = vunpack.c.l.b16 %v901
        %v1031 = vunpack.c.l.b16 %v902
        %v1032 = vunpack.c.l.b16 %v903
        %v1033 = vunpack.c.l.b16 %v904
        %v1034 = vunpack.c.l.b16 %v905
        %v1035 = vunpack.c.l.b16 %v906
        %v1036 = vunpack.c.l.b16 %v907
        %v1037 = vunpack.c.l.b16 %v908
        %v1038 = vunpack.c.l.b16 %v909
        %v1039 = vunpack.c.l.b16 %v910
        %v1040 = vunpack.c.l.b16 %v911
        %v1041 = vunpack.c.l.b16 %v912
        %v1042 = vunpack.c.l.b16 %v913
        %v1043 = vunpack.c.l.b16 %v914
        %v1044 = vunpack.c.l.b16 %v915
        %v1045 = vunpack.c.l.b16 %v916
        %v1046 = vpack.c.b16 %v1031, %v1030
        %v1047 = vpack.c.b16 %v1033, %v1032
        %v1048 = vpack.c.b16 %v1035, %v1034
        %v1049 = vpack.c.b16 %v1037, %v1036
        %v1050 = vpack.c.b16 %v1039, %v1038
        %v1051 = vpack.c.b16 %v1041, %v1040
        %v1052 = vpack.c.b16 %v1043, %v1042
        %v1053 = vpack.c.b16 %v1045, %v1044
        %v1055 = vsel %vm529, %v1046, 0
        %v1058 = vsel %vm529, %v1047, 0
        %v1061 = vsel %vm529, %v1048, 0
        %v1064 = vsel %vm529, %v1049, 0
        %v1067 = vsel %vm529, %v1050, 0
        %v1070 = vsel %vm529, %v1051, 0
        %v1073 = vsel %vm529, %v1052, 0
        %v1076 = vsel %vm529, %v1053, 0
        %1078 = vmatprep.subr.bf16.mxu0 0
        %1079 = vmatpush1.bf16.msra.mxu0 0
        %1080 = vmatprep.subr.bf16.mxu0 0
        %1081 = vmatpush1.bf16.msra.mxu0 0
        %1082 = vmatprep.subr.bf16.mxu0 0
        %1083 = vmatpush1.bf16.msra.mxu0 0
        %1084 = vmatprep.subr.bf16.mxu0 0
        %1085 = vmatpush1.bf16.msra.mxu0 0
        %1086 = vmatprep.subr.bf16.mxu0 0
        %1087 = vmatpush1.bf16.msra.mxu0 0
        %1088 = vmatprep.subr.bf16.mxu0 0
        %1089 = vmatpush1.bf16.msra.mxu0 0
        %1090 = vmatprep.subr.bf16.mxu0 %v899
        %1091 = vmatpush1.bf16.msra.mxu0 %v898
        %1092 = vmatprep.subr.bf16.mxu0 %v897
        %1093 = vmatpush1.bf16.msra.mxu0 %v896
        %1094 = vmatprep.subr.bf16.mxu0 0
        %1095 = vmatpush2.bf16.msra.mxu0 0
        %1096 = vmatprep.subr.bf16.mxu0 0
        %1097 = vmatpush2.bf16.msra.mxu0 0
        %1098 = vmatprep.subr.bf16.mxu0 0
        %1099 = vmatpush2.bf16.msra.mxu0 0
        %1100 = vmatprep.subr.bf16.mxu0 0
        %1101 = vmatpush2.bf16.msra.mxu0 0
        %1102 = vmatprep.subr.bf16.mxu0 0
        %1103 = vmatpush2.bf16.msra.mxu0 0
        %1104 = vmatprep.subr.bf16.mxu0 0
        %1105 = vmatpush2.bf16.msra.mxu0 0
        %1106 = vmatprep.subr.bf16.mxu0 0
        %1107 = vmatpush2.bf16.msra.mxu0 0
        %1108 = vmatprep.subr.bf16.mxu0 0
        %1109 = vmatpush2.bf16.msra.mxu0 0
        %1110 = vmatprep.mubr.bf16.mxu0 0
        %1111 = vmatmul.mubr.bf16.gmra.mxu0 %v1055
        %v1112 = vpop.f32.mrf.mxu0
        %v1113 = vadd.f32 %v937, %v1112
        %v1114 = vpop.f32.mrf.mxu0
        %v1115 = vadd.f32 %v937, %v1114
        %v1116 = vpop.f32.mrf.mxu0
        %v1117 = vadd.f32 %v942, %v1116
        %v1118 = vpop.f32.mrf.mxu0
        %v1119 = vadd.f32 %v942, %v1118
        %1120 = vmatprep.mubr.bf16.mxu0 0
        %1121 = vmatmul.mubr.bf16.gmra.mxu0 %v1058
        %v1122 = vpop.f32.mrf.mxu0
        %v1123 = vadd.f32 %v947, %v1122
        %v1124 = vpop.f32.mrf.mxu0
        %v1125 = vadd.f32 %v947, %v1124
        %v1126 = vpop.f32.mrf.mxu0
        %v1127 = vadd.f32 %v952, %v1126
        %v1128 = vpop.f32.mrf.mxu0
        %v1129 = vadd.f32 %v952, %v1128
        %1130 = vmatprep.mubr.bf16.mxu0 0
        %1131 = vmatmul.mubr.bf16.gmra.mxu0 %v1061
        %v1132 = vpop.f32.mrf.mxu0
        %v1133 = vadd.f32 %v957, %v1132
        %v1134 = vpop.f32.mrf.mxu0
        %v1135 = vadd.f32 %v957, %v1134
        %v1136 = vpop.f32.mrf.mxu0
        %v1137 = vadd.f32 %v962, %v1136
        %v1138 = vpop.f32.mrf.mxu0
        %v1139 = vadd.f32 %v962, %v1138
        %1140 = vmatprep.mubr.bf16.mxu0 0
        %1141 = vmatmul.mubr.bf16.gmra.mxu0 %v1064
        %v1142 = vpop.f32.mrf.mxu0
        %v1143 = vadd.f32 %v967, %v1142
        %v1144 = vpop.f32.mrf.mxu0
        %v1145 = vadd.f32 %v967, %v1144
        %v1146 = vpop.f32.mrf.mxu0
        %v1147 = vadd.f32 %v972, %v1146
        %v1148 = vpop.f32.mrf.mxu0
        %v1149 = vadd.f32 %v972, %v1148
        %1150 = vmatprep.mubr.bf16.mxu0 0
        %1151 = vmatmul.mubr.bf16.gmra.mxu0 %v1067
        %v1152 = vpop.f32.mrf.mxu0
        %v1153 = vadd.f32 %v977, %v1152
        %v1154 = vpop.f32.mrf.mxu0
        %v1155 = vadd.f32 %v977, %v1154
        %v1156 = vpop.f32.mrf.mxu0
        %v1157 = vadd.f32 %v982, %v1156
        %v1158 = vpop.f32.mrf.mxu0
        %v1159 = vadd.f32 %v982, %v1158
        %1160 = vmatprep.mubr.bf16.mxu0 0
        %1161 = vmatmul.mubr.bf16.gmra.mxu0 %v1070
        %v1162 = vpop.f32.mrf.mxu0
        %v1163 = vadd.f32 %v987, %v1162
        %v1164 = vpop.f32.mrf.mxu0
        %v1165 = vadd.f32 %v987, %v1164
        %v1166 = vpop.f32.mrf.mxu0
        %v1167 = vadd.f32 %v992, %v1166
        %v1168 = vpop.f32.mrf.mxu0
        %v1169 = vadd.f32 %v992, %v1168
        %1170 = vmatprep.mubr.bf16.mxu0 0
        %1171 = vmatmul.mubr.bf16.gmra.mxu0 %v1073
        %v1172 = vpop.f32.mrf.mxu0
        %v1173 = vadd.f32 %v997, %v1172
        %v1174 = vpop.f32.mrf.mxu0
        %v1175 = vadd.f32 %v997, %v1174
        %v1176 = vpop.f32.mrf.mxu0
        %v1177 = vadd.f32 %v1002, %v1176
        %v1178 = vpop.f32.mrf.mxu0
        %v1179 = vadd.f32 %v1002, %v1178
        %1180 = vmatprep.mubr.bf16.mxu0 0
        %1181 = vmatmul.mubr.bf16.gmra.mxu0 %v1076
        %v1182 = vpop.f32.mrf.mxu0
        %v1183 = vadd.f32 %v1007, %v1182
        %v1184 = vpop.f32.mrf.mxu0
        %v1185 = vadd.f32 %v1007, %v1184
        %v1186 = vpop.f32.mrf.mxu0
        %v1187 = vadd.f32 %v1012, %v1186
        %v1188 = vpop.f32.mrf.mxu0
        %v1189 = vadd.f32 %v1012, %v1188
        %1190 = vdwg.mxu0
        %v1191 = vmax.f32 %v1113, 0.0
        %v1192 = vmax.f32 %v1115, 0.0
        %v1193 = vmax.f32 %v1117, 0.0
        %v1194 = vmax.f32 %v1119, 0.0
        %v1195 = vmax.f32 %v1123, 0.0
        %v1196 = vmax.f32 %v1125, 0.0
        %v1197 = vmax.f32 %v1127, 0.0
        %v1198 = vmax.f32 %v1129, 0.0
        %v1199 = vmax.f32 %v1133, 0.0
        %v1200 = vmax.f32 %v1135, 0.0
        %v1201 = vmax.f32 %v1137, 0.0
        %v1202 = vmax.f32 %v1139, 0.0
        %v1203 = vmax.f32 %v1143, 0.0
        %v1204 = vmax.f32 %v1145, 0.0
        %v1205 = vmax.f32 %v1147, 0.0
        %v1206 = vmax.f32 %v1149, 0.0
        %v1207 = vmax.f32 %v1153, 0.0
        %v1208 = vmax.f32 %v1155, 0.0
        %v1209 = vmax.f32 %v1157, 0.0
        %v1210 = vmax.f32 %v1159, 0.0
        %v1211 = vmax.f32 %v1163, 0.0
        %v1212 = vmax.f32 %v1165, 0.0
        %v1213 = vmax.f32 %v1167, 0.0
        %v1214 = vmax.f32 %v1169, 0.0
        %v1215 = vmax.f32 %v1173, 0.0
        %v1216 = vmax.f32 %v1175, 0.0
        %v1217 = vmax.f32 %v1177, 0.0
        %v1218 = vmax.f32 %v1179, 0.0
        %v1219 = vmax.f32 %v1183, 0.0
        %v1220 = vmax.f32 %v1185, 0.0
        %v1221 = vmax.f32 %v1187, 0.0
        %v1222 = vmax.f32 %v1189, 0.0
        %s1223 = scalar_lea.vmem %s3, 128
        %v1224 = vld [vmem:[%s1223] sm:$0xff]
        %v1225 = vld [vmem:[%s1223 + $0x8] sm:$0xff]
        %v1226 = vld [vmem:[%s1223 + $0x10] sm:$0xff]
        %v1227 = vld [vmem:[%s1223 + $0x18] sm:$0xff]
        %v1228 = vld [vmem:[%s1223 + $0x20] sm:$0xff]
        %v1229 = vld [vmem:[%s1223 + $0x28] sm:$0xff]
        %v1230 = vld [vmem:[%s1223 + $0x30] sm:$0xff]
        %v1231 = vld [vmem:[%s1223 + $0x38] sm:$0xff]
        %v1232 = vld [vmem:[%s1223 + $0x40] sm:$0xff]
        %v1233 = vld [vmem:[%s1223 + $0x48] sm:$0xff]
        %v1234 = vld [vmem:[%s1223 + $0x50] sm:$0xff]
        %v1235 = vld [vmem:[%s1223 + $0x58] sm:$0xff]
        %v1236 = vld [vmem:[%s1223 + $0x60] sm:$0xff]
        %v1237 = vld [vmem:[%s1223 + $0x68] sm:$0xff]
        %v1238 = vld [vmem:[%s1223 + $0x70] sm:$0xff]
        %v1239 = vld [vmem:[%s1223 + $0x78] sm:$0xff]
        %1241 = vset.pattern.permute.xlu0 0
        %1242 = vperm.xlu0 %1241, %v1224
        %v1243 = vpop.permute.xlu0 %1242
        %1246 = vset.pattern.permute.xlu0 0
        %1247 = vperm.xlu0 %1246, %v1225
        %v1248 = vpop.permute.xlu0 %1247
        %1251 = vset.pattern.permute.xlu0 0
        %1252 = vperm.xlu0 %1251, %v1226
        %v1253 = vpop.permute.xlu0 %1252
        %1256 = vset.pattern.permute.xlu0 0
        %1257 = vperm.xlu0 %1256, %v1227
        %v1258 = vpop.permute.xlu0 %1257
        %1261 = vset.pattern.permute.xlu0 0
        %1262 = vperm.xlu0 %1261, %v1228
        %v1263 = vpop.permute.xlu0 %1262
        %1266 = vset.pattern.permute.xlu0 0
        %1267 = vperm.xlu0 %1266, %v1229
        %v1268 = vpop.permute.xlu0 %1267
        %1271 = vset.pattern.permute.xlu0 0
        %1272 = vperm.xlu0 %1271, %v1230
        %v1273 = vpop.permute.xlu0 %1272
        %1276 = vset.pattern.permute.xlu0 0
        %1277 = vperm.xlu0 %1276, %v1231
        %v1278 = vpop.permute.xlu0 %1277
        %1281 = vset.pattern.permute.xlu0 0
        %1282 = vperm.xlu0 %1281, %v1232
        %v1283 = vpop.permute.xlu0 %1282
        %1286 = vset.pattern.permute.xlu0 0
        %1287 = vperm.xlu0 %1286, %v1233
        %v1288 = vpop.permute.xlu0 %1287
        %1291 = vset.pattern.permute.xlu0 0
        %1292 = vperm.xlu0 %1291, %v1234
        %v1293 = vpop.permute.xlu0 %1292
        %1296 = vset.pattern.permute.xlu0 0
        %1297 = vperm.xlu0 %1296, %v1235
        %v1298 = vpop.permute.xlu0 %1297
        %1301 = vset.pattern.permute.xlu0 0
        %1302 = vperm.xlu0 %1301, %v1236
        %v1303 = vpop.permute.xlu0 %1302
        %1306 = vset.pattern.permute.xlu0 0
        %1307 = vperm.xlu0 %1306, %v1237
        %v1308 = vpop.permute.xlu0 %1307
        %1311 = vset.pattern.permute.xlu0 0
        %1312 = vperm.xlu0 %1311, %v1238
        %v1313 = vpop.permute.xlu0 %1312
        %1316 = vset.pattern.permute.xlu0 0
        %1317 = vperm.xlu0 %1316, %v1239
        %v1318 = vpop.permute.xlu0 %1317
        %v1320 = vmul.f32 %v1191, %v1243
        %v1321 = vmul.f32 %v1192, %v1243
        %v1322 = vmul.f32 %v1193, %v1248
        %v1323 = vmul.f32 %v1194, %v1248
        %v1324 = vmul.f32 %v1195, %v1253
        %v1325 = vmul.f32 %v1196, %v1253
        %v1326 = vmul.f32 %v1197, %v1258
        %v1327 = vmul.f32 %v1198, %v1258
        %v1328 = vmul.f32 %v1199, %v1263
        %v1329 = vmul.f32 %v1200, %v1263
        %v1330 = vmul.f32 %v1201, %v1268
        %v1331 = vmul.f32 %v1202, %v1268
        %v1332 = vmul.f32 %v1203, %v1273
        %v1333 = vmul.f32 %v1204, %v1273
        %v1334 = vmul.f32 %v1205, %v1278
        %v1335 = vmul.f32 %v1206, %v1278
        %v1336 = vmul.f32 %v1207, %v1283
        %v1337 = vmul.f32 %v1208, %v1283
        %v1338 = vmul.f32 %v1209, %v1288
        %v1339 = vmul.f32 %v1210, %v1288
        %v1340 = vmul.f32 %v1211, %v1293
        %v1341 = vmul.f32 %v1212, %v1293
        %v1342 = vmul.f32 %v1213, %v1298
        %v1343 = vmul.f32 %v1214, %v1298
        %v1344 = vmul.f32 %v1215, %v1303
        %v1345 = vmul.f32 %v1216, %v1303
        %v1346 = vmul.f32 %v1217, %v1308
        %v1347 = vmul.f32 %v1218, %v1308
        %v1348 = vmul.f32 %v1219, %v1313
        %v1349 = vmul.f32 %v1220, %v1313
        %v1350 = vmul.f32 %v1221, %v1318
        %v1351 = vmul.f32 %v1222, %v1318
        %v1352 = vadd.f32 %v1320, %v1322
        %v1353 = vadd.f32 %v1352, %v1324
        %v1354 = vadd.f32 %v1353, %v1326
        %v1355 = vadd.f32 %v1354, %v1328
        %v1356 = vadd.f32 %v1355, %v1330
        %v1357 = vadd.f32 %v1356, %v1332
        %v1358 = vadd.f32 %v1357, %v1334
        %v1359 = vadd.f32 %v1358, %v1336
        %v1360 = vadd.f32 %v1359, %v1338
        %v1361 = vadd.f32 %v1360, %v1340
        %v1362 = vadd.f32 %v1361, %v1342
        %v1363 = vadd.f32 %v1362, %v1344
        %v1364 = vadd.f32 %v1363, %v1346
        %v1365 = vadd.f32 %v1364, %v1348
        %v1366 = vadd.f32 %v1365, %v1350
        %v1367 = vrot.slane %v1366, 4
        %v1368 = vadd.f32 %v1366, %v1367
        %v1369 = vrot.slane %v1368, 2
        %v1370 = vadd.f32 %v1368, %v1369
        %v1371 = vrot.slane %v1370, 1
        %v1372 = vadd.f32 %v1370, %v1371
        %v1373 = vadd.f32 %v1321, %v1323
        %v1374 = vadd.f32 %v1373, %v1325
        %v1375 = vadd.f32 %v1374, %v1327
        %v1376 = vadd.f32 %v1375, %v1329
        %v1377 = vadd.f32 %v1376, %v1331
        %v1378 = vadd.f32 %v1377, %v1333
        %v1379 = vadd.f32 %v1378, %v1335
        %v1380 = vadd.f32 %v1379, %v1337
        %v1381 = vadd.f32 %v1380, %v1339
        %v1382 = vadd.f32 %v1381, %v1341
        %v1383 = vadd.f32 %v1382, %v1343
        %v1384 = vadd.f32 %v1383, %v1345
        %v1385 = vadd.f32 %v1384, %v1347
        %v1386 = vadd.f32 %v1385, %v1349
        %v1387 = vadd.f32 %v1386, %v1351
        %v1388 = vrot.slane %v1387, 4
        %v1389 = vadd.f32 %v1387, %v1388
        %v1390 = vrot.slane %v1389, 2
        %v1391 = vadd.f32 %v1389, %v1390
        %v1392 = vrot.slane %v1391, 1
        %v1393 = vadd.f32 %v1391, %v1392
        %v1394 = vadd.f32 %v869, %v1372
        %v1395 = vadd.f32 %v870, %v1393
        %v1396 = vpack.c.bf16 %v1193, %v1191
        %v1397 = vpack.c.bf16 %v1194, %v1192
        %v1398 = vpack.c.bf16 %v1197, %v1195
        %v1399 = vpack.c.bf16 %v1198, %v1196
        %v1400 = vpack.c.bf16 %v1201, %v1199
        %v1401 = vpack.c.bf16 %v1202, %v1200
        %v1402 = vpack.c.bf16 %v1205, %v1203
        %v1403 = vpack.c.bf16 %v1206, %v1204
        %v1404 = vpack.c.bf16 %v1209, %v1207
        %v1405 = vpack.c.bf16 %v1210, %v1208
        %v1406 = vpack.c.bf16 %v1213, %v1211
        %v1407 = vpack.c.bf16 %v1214, %v1212
        %v1408 = vpack.c.bf16 %v1217, %v1215
        %v1409 = vpack.c.bf16 %v1218, %v1216
        %v1410 = vpack.c.bf16 %v1221, %v1219
        %v1411 = vpack.c.bf16 %v1222, %v1220
        %s1412 = scalar_lea.vmem %s333, 128 [#allocation3]
        %v1413 = vld [vmem:[%s1412] sm:$0xff]
        %v1414 = vld [vmem:[%s1412 + $0x8] sm:$0xff]
        %v1415 = vld [vmem:[%s1412 + $0x10] sm:$0xff]
        %v1416 = vld [vmem:[%s1412 + $0x18] sm:$0xff]
        %v1417 = vld [vmem:[%s1412 + $0x20] sm:$0xff]
        %v1418 = vld [vmem:[%s1412 + $0x28] sm:$0xff]
        %v1419 = vld [vmem:[%s1412 + $0x30] sm:$0xff]
        %v1420 = vld [vmem:[%s1412 + $0x38] sm:$0xff]
        %v1421 = vpack.c.bf16 %v1415, %v1413
        %v1422 = vpack.c.bf16 %v1416, %v1414
        %v1423 = vpack.c.bf16 %v1419, %v1417
        %v1424 = vpack.c.bf16 %v1420, %v1418
        %s1425 = scalar_lea.vmem %s1, 128
        %v1426 = vld [vmem:[%s1425] sm:$0xf]
        %v1427 = vld [vmem:[%s1425 + $0x4] sm:$0xf]
        %v1428 = vld [vmem:[%s1425 + $0x8] sm:$0xf]
        %v1429 = vld [vmem:[%s1425 + $0xc] sm:$0xf]
        %v1430 = vld [vmem:[%s1425 + $0x10] sm:$0xf]
        %v1431 = vld [vmem:[%s1425 + $0x14] sm:$0xf]
        %v1432 = vld [vmem:[%s1425 + $0x18] sm:$0xf]
        %v1433 = vld [vmem:[%s1425 + $0x1c] sm:$0xf]
        %v1434 = vld [vmem:[%s1425 + $0x20] sm:$0xf]
        %v1435 = vld [vmem:[%s1425 + $0x24] sm:$0xf]
        %v1436 = vld [vmem:[%s1425 + $0x28] sm:$0xf]
        %v1437 = vld [vmem:[%s1425 + $0x2c] sm:$0xf]
        %v1438 = vld [vmem:[%s1425 + $0x30] sm:$0xf]
        %v1439 = vld [vmem:[%s1425 + $0x34] sm:$0xf]
        %v1440 = vld [vmem:[%s1425 + $0x38] sm:$0xf]
        %v1441 = vld [vmem:[%s1425 + $0x3c] sm:$0xf]
        %s1442 = scalar_lea.vmem %s2, 256
        %v1443 = vld [vmem:[%s1442] sm:$0xff]
        %v1444 = vld [vmem:[%s1442 + $0x8] sm:$0xff]
        %v1445 = vld [vmem:[%s1442 + $0x10] sm:$0xff]
        %v1446 = vld [vmem:[%s1442 + $0x18] sm:$0xff]
        %v1447 = vld [vmem:[%s1442 + $0x20] sm:$0xff]
        %v1448 = vld [vmem:[%s1442 + $0x28] sm:$0xff]
        %v1449 = vld [vmem:[%s1442 + $0x30] sm:$0xff]
        %v1450 = vld [vmem:[%s1442 + $0x38] sm:$0xff]
        %v1451 = vld [vmem:[%s1442 + $0x40] sm:$0xff]
        %v1452 = vld [vmem:[%s1442 + $0x48] sm:$0xff]
        %v1453 = vld [vmem:[%s1442 + $0x50] sm:$0xff]
        %v1454 = vld [vmem:[%s1442 + $0x58] sm:$0xff]
        %v1455 = vld [vmem:[%s1442 + $0x60] sm:$0xff]
        %v1456 = vld [vmem:[%s1442 + $0x68] sm:$0xff]
        %v1457 = vld [vmem:[%s1442 + $0x70] sm:$0xff]
        %v1458 = vld [vmem:[%s1442 + $0x78] sm:$0xff]
        %1460 = vset.pattern.permute.xlu0 0
        %1461 = vperm.xlu0 %1460, %v1443
        %v1462 = vpop.permute.xlu0 %1461
        %1465 = vset.pattern.permute.xlu0 0
        %1466 = vperm.xlu0 %1465, %v1444
        %v1467 = vpop.permute.xlu0 %1466
        %1470 = vset.pattern.permute.xlu0 0
        %1471 = vperm.xlu0 %1470, %v1445
        %v1472 = vpop.permute.xlu0 %1471
        %1475 = vset.pattern.permute.xlu0 0
        %1476 = vperm.xlu0 %1475, %v1446
        %v1477 = vpop.permute.xlu0 %1476
        %1480 = vset.pattern.permute.xlu0 0
        %1481 = vperm.xlu0 %1480, %v1447
        %v1482 = vpop.permute.xlu0 %1481
        %1485 = vset.pattern.permute.xlu0 0
        %1486 = vperm.xlu0 %1485, %v1448
        %v1487 = vpop.permute.xlu0 %1486
        %1490 = vset.pattern.permute.xlu0 0
        %1491 = vperm.xlu0 %1490, %v1449
        %v1492 = vpop.permute.xlu0 %1491
        %1495 = vset.pattern.permute.xlu0 0
        %1496 = vperm.xlu0 %1495, %v1450
        %v1497 = vpop.permute.xlu0 %1496
        %1500 = vset.pattern.permute.xlu0 0
        %1501 = vperm.xlu0 %1500, %v1451
        %v1502 = vpop.permute.xlu0 %1501
        %1505 = vset.pattern.permute.xlu0 0
        %1506 = vperm.xlu0 %1505, %v1452
        %v1507 = vpop.permute.xlu0 %1506
        %1510 = vset.pattern.permute.xlu0 0
        %1511 = vperm.xlu0 %1510, %v1453
        %v1512 = vpop.permute.xlu0 %1511
        %1515 = vset.pattern.permute.xlu0 0
        %1516 = vperm.xlu0 %1515, %v1454
        %v1517 = vpop.permute.xlu0 %1516
        %1520 = vset.pattern.permute.xlu0 0
        %1521 = vperm.xlu0 %1520, %v1455
        %v1522 = vpop.permute.xlu0 %1521
        %1525 = vset.pattern.permute.xlu0 0
        %1526 = vperm.xlu0 %1525, %v1456
        %v1527 = vpop.permute.xlu0 %1526
        %1530 = vset.pattern.permute.xlu0 0
        %1531 = vperm.xlu0 %1530, %v1457
        %v1532 = vpop.permute.xlu0 %1531
        %1535 = vset.pattern.permute.xlu0 0
        %1536 = vperm.xlu0 %1535, %v1458
        %v1537 = vpop.permute.xlu0 %1536
        %v1555 = vunpack.c.l.b16 %v1426
        %v1556 = vunpack.c.l.b16 %v1427
        %v1557 = vunpack.c.l.b16 %v1428
        %v1558 = vunpack.c.l.b16 %v1429
        %v1559 = vunpack.c.l.b16 %v1430
        %v1560 = vunpack.c.l.b16 %v1431
        %v1561 = vunpack.c.l.b16 %v1432
        %v1562 = vunpack.c.l.b16 %v1433
        %v1563 = vunpack.c.l.b16 %v1434
        %v1564 = vunpack.c.l.b16 %v1435
        %v1565 = vunpack.c.l.b16 %v1436
        %v1566 = vunpack.c.l.b16 %v1437
        %v1567 = vunpack.c.l.b16 %v1438
        %v1568 = vunpack.c.l.b16 %v1439
        %v1569 = vunpack.c.l.b16 %v1440
        %v1570 = vunpack.c.l.b16 %v1441
        %v1571 = vpack.c.b16 %v1556, %v1555
        %v1572 = vpack.c.b16 %v1558, %v1557
        %v1573 = vpack.c.b16 %v1560, %v1559
        %v1574 = vpack.c.b16 %v1562, %v1561
        %v1575 = vpack.c.b16 %v1564, %v1563
        %v1576 = vpack.c.b16 %v1566, %v1565
        %v1577 = vpack.c.b16 %v1568, %v1567
        %v1578 = vpack.c.b16 %v1570, %v1569
        %v1580 = vsel %vm529, %v1571, 0
        %v1583 = vsel %vm529, %v1572, 0
        %v1586 = vsel %vm529, %v1573, 0
        %v1589 = vsel %vm529, %v1574, 0
        %v1592 = vsel %vm529, %v1575, 0
        %v1595 = vsel %vm529, %v1576, 0
        %v1598 = vsel %vm529, %v1577, 0
        %v1601 = vsel %vm529, %v1578, 0
        %1603 = vmatprep.subr.bf16.mxu0 0
        %1604 = vmatpush1.bf16.msra.mxu0 0
        %1605 = vmatprep.subr.bf16.mxu0 0
        %1606 = vmatpush1.bf16.msra.mxu0 0
        %1607 = vmatprep.subr.bf16.mxu0 0
        %1608 = vmatpush1.bf16.msra.mxu0 0
        %1609 = vmatprep.subr.bf16.mxu0 0
        %1610 = vmatpush1.bf16.msra.mxu0 0
        %1611 = vmatprep.subr.bf16.mxu0 0
        %1612 = vmatpush1.bf16.msra.mxu0 0
        %1613 = vmatprep.subr.bf16.mxu0 0
        %1614 = vmatpush1.bf16.msra.mxu0 0
        %1615 = vmatprep.subr.bf16.mxu0 %v1424
        %1616 = vmatpush1.bf16.msra.mxu0 %v1423
        %1617 = vmatprep.subr.bf16.mxu0 %v1422
        %1618 = vmatpush1.bf16.msra.mxu0 %v1421
        %1619 = vmatprep.subr.bf16.mxu0 0
        %1620 = vmatpush2.bf16.msra.mxu0 0
        %1621 = vmatprep.subr.bf16.mxu0 0
        %1622 = vmatpush2.bf16.msra.mxu0 0
        %1623 = vmatprep.subr.bf16.mxu0 0
        %1624 = vmatpush2.bf16.msra.mxu0 0
        %1625 = vmatprep.subr.bf16.mxu0 0
        %1626 = vmatpush2.bf16.msra.mxu0 0
        %1627 = vmatprep.subr.bf16.mxu0 0
        %1628 = vmatpush2.bf16.msra.mxu0 0
        %1629 = vmatprep.subr.bf16.mxu0 0
        %1630 = vmatpush2.bf16.msra.mxu0 0
        %1631 = vmatprep.subr.bf16.mxu0 0
        %1632 = vmatpush2.bf16.msra.mxu0 0
        %1633 = vmatprep.subr.bf16.mxu0 0
        %1634 = vmatpush2.bf16.msra.mxu0 0
        %1635 = vmatprep.mubr.bf16.mxu0 0
        %1636 = vmatmul.mubr.bf16.gmra.mxu0 %v1580
        %v1637 = vpop.f32.mrf.mxu0
        %v1638 = vadd.f32 %v1462, %v1637
        %v1639 = vpop.f32.mrf.mxu0
        %v1640 = vadd.f32 %v1462, %v1639
        %v1641 = vpop.f32.mrf.mxu0
        %v1642 = vadd.f32 %v1467, %v1641
        %v1643 = vpop.f32.mrf.mxu0
        %v1644 = vadd.f32 %v1467, %v1643
        %1645 = vmatprep.mubr.bf16.mxu0 0
        %1646 = vmatmul.mubr.bf16.gmra.mxu0 %v1583
        %v1647 = vpop.f32.mrf.mxu0
        %v1648 = vadd.f32 %v1472, %v1647
        %v1649 = vpop.f32.mrf.mxu0
        %v1650 = vadd.f32 %v1472, %v1649
        %v1651 = vpop.f32.mrf.mxu0
        %v1652 = vadd.f32 %v1477, %v1651
        %v1653 = vpop.f32.mrf.mxu0
        %v1654 = vadd.f32 %v1477, %v1653
        %1655 = vmatprep.mubr.bf16.mxu0 0
        %1656 = vmatmul.mubr.bf16.gmra.mxu0 %v1586
        %v1657 = vpop.f32.mrf.mxu0
        %v1658 = vadd.f32 %v1482, %v1657
        %v1659 = vpop.f32.mrf.mxu0
        %v1660 = vadd.f32 %v1482, %v1659
        %v1661 = vpop.f32.mrf.mxu0
        %v1662 = vadd.f32 %v1487, %v1661
        %v1663 = vpop.f32.mrf.mxu0
        %v1664 = vadd.f32 %v1487, %v1663
        %1665 = vmatprep.mubr.bf16.mxu0 0
        %1666 = vmatmul.mubr.bf16.gmra.mxu0 %v1589
        %v1667 = vpop.f32.mrf.mxu0
        %v1668 = vadd.f32 %v1492, %v1667
        %v1669 = vpop.f32.mrf.mxu0
        %v1670 = vadd.f32 %v1492, %v1669
        %v1671 = vpop.f32.mrf.mxu0
        %v1672 = vadd.f32 %v1497, %v1671
        %v1673 = vpop.f32.mrf.mxu0
        %v1674 = vadd.f32 %v1497, %v1673
        %1675 = vmatprep.mubr.bf16.mxu0 0
        %1676 = vmatmul.mubr.bf16.gmra.mxu0 %v1592
        %v1677 = vpop.f32.mrf.mxu0
        %v1678 = vadd.f32 %v1502, %v1677
        %v1679 = vpop.f32.mrf.mxu0
        %v1680 = vadd.f32 %v1502, %v1679
        %v1681 = vpop.f32.mrf.mxu0
        %v1682 = vadd.f32 %v1507, %v1681
        %v1683 = vpop.f32.mrf.mxu0
        %v1684 = vadd.f32 %v1507, %v1683
        %1685 = vmatprep.mubr.bf16.mxu0 0
        %1686 = vmatmul.mubr.bf16.gmra.mxu0 %v1595
        %v1687 = vpop.f32.mrf.mxu0
        %v1688 = vadd.f32 %v1512, %v1687
        %v1689 = vpop.f32.mrf.mxu0
        %v1690 = vadd.f32 %v1512, %v1689
        %v1691 = vpop.f32.mrf.mxu0
        %v1692 = vadd.f32 %v1517, %v1691
        %v1693 = vpop.f32.mrf.mxu0
        %v1694 = vadd.f32 %v1517, %v1693
        %1695 = vmatprep.mubr.bf16.mxu0 0
        %1696 = vmatmul.mubr.bf16.gmra.mxu0 %v1598
        %v1697 = vpop.f32.mrf.mxu0
        %v1698 = vadd.f32 %v1522, %v1697
        %v1699 = vpop.f32.mrf.mxu0
        %v1700 = vadd.f32 %v1522, %v1699
        %v1701 = vpop.f32.mrf.mxu0
        %v1702 = vadd.f32 %v1527, %v1701
        %v1703 = vpop.f32.mrf.mxu0
        %v1704 = vadd.f32 %v1527, %v1703
        %1705 = vmatprep.mubr.bf16.mxu0 0
        %1706 = vmatmul.mubr.bf16.gmra.mxu0 %v1601
        %v1707 = vpop.f32.mrf.mxu0
        %v1708 = vadd.f32 %v1532, %v1707
        %v1709 = vpop.f32.mrf.mxu0
        %v1710 = vadd.f32 %v1532, %v1709
        %v1711 = vpop.f32.mrf.mxu0
        %v1712 = vadd.f32 %v1537, %v1711
        %v1713 = vpop.f32.mrf.mxu0
        %v1714 = vadd.f32 %v1537, %v1713
        %1715 = vdwg.mxu0
        %v1716 = vmax.f32 %v1638, 0.0
        %v1717 = vmax.f32 %v1640, 0.0
        %v1718 = vmax.f32 %v1642, 0.0
        %v1719 = vmax.f32 %v1644, 0.0
        %v1720 = vmax.f32 %v1648, 0.0
        %v1721 = vmax.f32 %v1650, 0.0
        %v1722 = vmax.f32 %v1652, 0.0
        %v1723 = vmax.f32 %v1654, 0.0
        %v1724 = vmax.f32 %v1658, 0.0
        %v1725 = vmax.f32 %v1660, 0.0
        %v1726 = vmax.f32 %v1662, 0.0
        %v1727 = vmax.f32 %v1664, 0.0
        %v1728 = vmax.f32 %v1668, 0.0
        %v1729 = vmax.f32 %v1670, 0.0
        %v1730 = vmax.f32 %v1672, 0.0
        %v1731 = vmax.f32 %v1674, 0.0
        %v1732 = vmax.f32 %v1678, 0.0
        %v1733 = vmax.f32 %v1680, 0.0
        %v1734 = vmax.f32 %v1682, 0.0
        %v1735 = vmax.f32 %v1684, 0.0
        %v1736 = vmax.f32 %v1688, 0.0
        %v1737 = vmax.f32 %v1690, 0.0
        %v1738 = vmax.f32 %v1692, 0.0
        %v1739 = vmax.f32 %v1694, 0.0
        %v1740 = vmax.f32 %v1698, 0.0
        %v1741 = vmax.f32 %v1700, 0.0
        %v1742 = vmax.f32 %v1702, 0.0
        %v1743 = vmax.f32 %v1704, 0.0
        %v1744 = vmax.f32 %v1708, 0.0
        %v1745 = vmax.f32 %v1710, 0.0
        %v1746 = vmax.f32 %v1712, 0.0
        %v1747 = vmax.f32 %v1714, 0.0
        %s1748 = scalar_lea.vmem %s3, 256
        %v1749 = vld [vmem:[%s1748] sm:$0xff]
        %v1750 = vld [vmem:[%s1748 + $0x8] sm:$0xff]
        %v1751 = vld [vmem:[%s1748 + $0x10] sm:$0xff]
        %v1752 = vld [vmem:[%s1748 + $0x18] sm:$0xff]
        %v1753 = vld [vmem:[%s1748 + $0x20] sm:$0xff]
        %v1754 = vld [vmem:[%s1748 + $0x28] sm:$0xff]
        %v1755 = vld [vmem:[%s1748 + $0x30] sm:$0xff]
        %v1756 = vld [vmem:[%s1748 + $0x38] sm:$0xff]
        %v1757 = vld [vmem:[%s1748 + $0x40] sm:$0xff]
        %v1758 = vld [vmem:[%s1748 + $0x48] sm:$0xff]
        %v1759 = vld [vmem:[%s1748 + $0x50] sm:$0xff]
        %v1760 = vld [vmem:[%s1748 + $0x58] sm:$0xff]
        %v1761 = vld [vmem:[%s1748 + $0x60] sm:$0xff]
        %v1762 = vld [vmem:[%s1748 + $0x68] sm:$0xff]
        %v1763 = vld [vmem:[%s1748 + $0x70] sm:$0xff]
        %v1764 = vld [vmem:[%s1748 + $0x78] sm:$0xff]
        %1766 = vset.pattern.permute.xlu0 0
        %1767 = vperm.xlu0 %1766, %v1749
        %v1768 = vpop.permute.xlu0 %1767
        %1771 = vset.pattern.permute.xlu0 0
        %1772 = vperm.xlu0 %1771, %v1750
        %v1773 = vpop.permute.xlu0 %1772
        %1776 = vset.pattern.permute.xlu0 0
        %1777 = vperm.xlu0 %1776, %v1751
        %v1778 = vpop.permute.xlu0 %1777
        %1781 = vset.pattern.permute.xlu0 0
        %1782 = vperm.xlu0 %1781, %v1752
        %v1783 = vpop.permute.xlu0 %1782
        %1786 = vset.pattern.permute.xlu0 0
        %1787 = vperm.xlu0 %1786, %v1753
        %v1788 = vpop.permute.xlu0 %1787
        %1791 = vset.pattern.permute.xlu0 0
        %1792 = vperm.xlu0 %1791, %v1754
        %v1793 = vpop.permute.xlu0 %1792
        %1796 = vset.pattern.permute.xlu0 0
        %1797 = vperm.xlu0 %1796, %v1755
        %v1798 = vpop.permute.xlu0 %1797
        %1801 = vset.pattern.permute.xlu0 0
        %1802 = vperm.xlu0 %1801, %v1756
        %v1803 = vpop.permute.xlu0 %1802
        %1806 = vset.pattern.permute.xlu0 0
        %1807 = vperm.xlu0 %1806, %v1757
        %v1808 = vpop.permute.xlu0 %1807
        %1811 = vset.pattern.permute.xlu0 0
        %1812 = vperm.xlu0 %1811, %v1758
        %v1813 = vpop.permute.xlu0 %1812
        %1816 = vset.pattern.permute.xlu0 0
        %1817 = vperm.xlu0 %1816, %v1759
        %v1818 = vpop.permute.xlu0 %1817
        %1821 = vset.pattern.permute.xlu0 0
        %1822 = vperm.xlu0 %1821, %v1760
        %v1823 = vpop.permute.xlu0 %1822
        %1826 = vset.pattern.permute.xlu0 0
        %1827 = vperm.xlu0 %1826, %v1761
        %v1828 = vpop.permute.xlu0 %1827
        %1831 = vset.pattern.permute.xlu0 0
        %1832 = vperm.xlu0 %1831, %v1762
        %v1833 = vpop.permute.xlu0 %1832
        %1836 = vset.pattern.permute.xlu0 0
        %1837 = vperm.xlu0 %1836, %v1763
        %v1838 = vpop.permute.xlu0 %1837
        %1841 = vset.pattern.permute.xlu0 0
        %1842 = vperm.xlu0 %1841, %v1764
        %v1843 = vpop.permute.xlu0 %1842
        %v1845 = vmul.f32 %v1716, %v1768
        %v1846 = vmul.f32 %v1717, %v1768
        %v1847 = vmul.f32 %v1718, %v1773
        %v1848 = vmul.f32 %v1719, %v1773
        %v1849 = vmul.f32 %v1720, %v1778
        %v1850 = vmul.f32 %v1721, %v1778
        %v1851 = vmul.f32 %v1722, %v1783
        %v1852 = vmul.f32 %v1723, %v1783
        %v1853 = vmul.f32 %v1724, %v1788
        %v1854 = vmul.f32 %v1725, %v1788
        %v1855 = vmul.f32 %v1726, %v1793
        %v1856 = vmul.f32 %v1727, %v1793
        %v1857 = vmul.f32 %v1728, %v1798
        %v1858 = vmul.f32 %v1729, %v1798
        %v1859 = vmul.f32 %v1730, %v1803
        %v1860 = vmul.f32 %v1731, %v1803
        %v1861 = vmul.f32 %v1732, %v1808
        %v1862 = vmul.f32 %v1733, %v1808
        %v1863 = vmul.f32 %v1734, %v1813
        %v1864 = vmul.f32 %v1735, %v1813
        %v1865 = vmul.f32 %v1736, %v1818
        %v1866 = vmul.f32 %v1737, %v1818
        %v1867 = vmul.f32 %v1738, %v1823
        %v1868 = vmul.f32 %v1739, %v1823
        %v1869 = vmul.f32 %v1740, %v1828
        %v1870 = vmul.f32 %v1741, %v1828
        %v1871 = vmul.f32 %v1742, %v1833
        %v1872 = vmul.f32 %v1743, %v1833
        %v1873 = vmul.f32 %v1744, %v1838
        %v1874 = vmul.f32 %v1745, %v1838
        %v1875 = vmul.f32 %v1746, %v1843
        %v1876 = vmul.f32 %v1747, %v1843
        %v1877 = vadd.f32 %v1845, %v1847
        %v1878 = vadd.f32 %v1877, %v1849
        %v1879 = vadd.f32 %v1878, %v1851
        %v1880 = vadd.f32 %v1879, %v1853
        %v1881 = vadd.f32 %v1880, %v1855
        %v1882 = vadd.f32 %v1881, %v1857
        %v1883 = vadd.f32 %v1882, %v1859
        %v1884 = vadd.f32 %v1883, %v1861
        %v1885 = vadd.f32 %v1884, %v1863
        %v1886 = vadd.f32 %v1885, %v1865
        %v1887 = vadd.f32 %v1886, %v1867
        %v1888 = vadd.f32 %v1887, %v1869
        %v1889 = vadd.f32 %v1888, %v1871
        %v1890 = vadd.f32 %v1889, %v1873
        %v1891 = vadd.f32 %v1890, %v1875
        %v1892 = vrot.slane %v1891, 4
        %v1893 = vadd.f32 %v1891, %v1892
        %v1894 = vrot.slane %v1893, 2
        %v1895 = vadd.f32 %v1893, %v1894
        %v1896 = vrot.slane %v1895, 1
        %v1897 = vadd.f32 %v1895, %v1896
        %v1898 = vadd.f32 %v1846, %v1848
        %v1899 = vadd.f32 %v1898, %v1850
        %v1900 = vadd.f32 %v1899, %v1852
        %v1901 = vadd.f32 %v1900, %v1854
        %v1902 = vadd.f32 %v1901, %v1856
        %v1903 = vadd.f32 %v1902, %v1858
        %v1904 = vadd.f32 %v1903, %v1860
        %v1905 = vadd.f32 %v1904, %v1862
        %v1906 = vadd.f32 %v1905, %v1864
        %v1907 = vadd.f32 %v1906, %v1866
        %v1908 = vadd.f32 %v1907, %v1868
        %v1909 = vadd.f32 %v1908, %v1870
        %v1910 = vadd.f32 %v1909, %v1872
        %v1911 = vadd.f32 %v1910, %v1874
        %v1912 = vadd.f32 %v1911, %v1876
        %v1913 = vrot.slane %v1912, 4
        %v1914 = vadd.f32 %v1912, %v1913
        %v1915 = vrot.slane %v1914, 2
        %v1916 = vadd.f32 %v1914, %v1915
        %v1917 = vrot.slane %v1916, 1
        %v1918 = vadd.f32 %v1916, %v1917
        %v1919 = vadd.f32 %v1394, %v1897
        %v1920 = vadd.f32 %v1395, %v1918
        %v1921 = vpack.c.bf16 %v1718, %v1716
        %v1922 = vpack.c.bf16 %v1719, %v1717
        %v1923 = vpack.c.bf16 %v1722, %v1720
        %v1924 = vpack.c.bf16 %v1723, %v1721
        %v1925 = vpack.c.bf16 %v1726, %v1724
        %v1926 = vpack.c.bf16 %v1727, %v1725
        %v1927 = vpack.c.bf16 %v1730, %v1728
        %v1928 = vpack.c.bf16 %v1731, %v1729
        %v1929 = vpack.c.bf16 %v1734, %v1732
        %v1930 = vpack.c.bf16 %v1735, %v1733
        %v1931 = vpack.c.bf16 %v1738, %v1736
        %v1932 = vpack.c.bf16 %v1739, %v1737
        %v1933 = vpack.c.bf16 %v1742, %v1740
        %v1934 = vpack.c.bf16 %v1743, %v1741
        %v1935 = vpack.c.bf16 %v1746, %v1744
        %v1936 = vpack.c.bf16 %v1747, %v1745
        %v1937 = vld [vmem:[%s5] sm:$0xff]
        %v1938 = vld [vmem:[%s5 + $0x8] sm:$0xf]
        %v1939 = vld [vmem:[%s5 + $0xc] sm:$0xff]
        %v1940 = vld [vmem:[%s5 + $0x14] sm:$0xf]
        %v1941 = vld [vmem:[%s5 + $0x18] sm:$0xff]
        %v1942 = vld [vmem:[%s5 + $0x20] sm:$0xf]
        %v1943 = vld [vmem:[%s5 + $0x24] sm:$0xff]
        %v1944 = vld [vmem:[%s5 + $0x2c] sm:$0xf]
        %v1945 = vld [vmem:[%s5 + $0x30] sm:$0xff]
        %v1946 = vld [vmem:[%s5 + $0x38] sm:$0xf]
        %v1947 = vld [vmem:[%s5 + $0x3c] sm:$0xff]
        %v1948 = vld [vmem:[%s5 + $0x44] sm:$0xf]
        %v1949 = vld [vmem:[%s5 + $0x48] sm:$0xff]
        %v1950 = vld [vmem:[%s5 + $0x50] sm:$0xf]
        %v1951 = vld [vmem:[%s5 + $0x54] sm:$0xff]
        %v1952 = vld [vmem:[%s5 + $0x5c] sm:$0xf]
        %v1953 = vld [vmem:[%s5 + $0x60] sm:$0xff]
        %v1954 = vld [vmem:[%s5 + $0x68] sm:$0xf]
        %v1955 = vld [vmem:[%s5 + $0x6c] sm:$0xff]
        %v1956 = vld [vmem:[%s5 + $0x74] sm:$0xf]
        %v1957 = vld [vmem:[%s5 + $0x78] sm:$0xff]
        %v1958 = vld [vmem:[%s5 + $0x80] sm:$0xf]
        %v1959 = vld [vmem:[%s5 + $0x84] sm:$0xff]
        %v1960 = vld [vmem:[%s5 + $0x8c] sm:$0xf]
        %v1961 = vld [vmem:[%s5 + $0x90] sm:$0xff]
        %v1962 = vld [vmem:[%s5 + $0x98] sm:$0xf]
        %v1963 = vld [vmem:[%s5 + $0x9c] sm:$0xff]
        %v1964 = vld [vmem:[%s5 + $0xa4] sm:$0xf]
        %v1965 = vld [vmem:[%s5 + $0xa8] sm:$0xff]
        %v1966 = vld [vmem:[%s5 + $0xb0] sm:$0xf]
        %v1967 = vld [vmem:[%s5 + $0xb4] sm:$0xff]
        %v1968 = vld [vmem:[%s5 + $0xbc] sm:$0xf]
        %s1969 = sld [smem:[#allocation2]]
        %v1970 = vstv %s1969
        %v1971 = vadd.f32 %v1919, %v1970
        %v1972 = vadd.f32 %v1920, %v1970
        %v1973 = vxor.u32 %v1971, 2147483648
        %v1974 = vxor.u32 %v1972, 2147483648
        %v1975 = vmul.f32 %v1973, 1.442695
        %v1976 = vpow.pop %v1975
        %v1977 = vmul.f32 %v1974, 1.442695
        %v1978 = vpow.pop %v1977
        %v1979 = vadd.f32 %v1976, 1.0
        %v1980 = vadd.f32 %v1978, 1.0
        %v1981 = vrcp.pop %v1979
        %v1982 = vmul.f32 1.0, %v1981
        %v1983 = vrcp.pop %v1980
        %v1984 = vmul.f32 1.0, %v1983
        %v1985 = vld [vmem:[%s6] sm:$0xff]
        %v1986 = vld [vmem:[%s6 + $0x8] sm:$0xff]
        %v1987 = vld [vmem:[%s6 + $0x10] sm:$0xff]
        %v1988 = vld [vmem:[%s6 + $0x18] sm:$0xff]
        %v1989 = vld [vmem:[%s6 + $0x20] sm:$0xff]
        %v1990 = vld [vmem:[%s6 + $0x28] sm:$0xff]
        %v1991 = vld [vmem:[%s6 + $0x30] sm:$0xff]
        %v1992 = vld [vmem:[%s6 + $0x38] sm:$0xff]
        %v1993 = vld [vmem:[%s6 + $0x40] sm:$0xff]
        %v1994 = vld [vmem:[%s6 + $0x48] sm:$0xff]
        %v1995 = vld [vmem:[%s6 + $0x50] sm:$0xff]
        %v1996 = vld [vmem:[%s6 + $0x58] sm:$0xff]
        %v1997 = vld [vmem:[%s6 + $0x60] sm:$0xff]
        %v1998 = vld [vmem:[%s6 + $0x68] sm:$0xff]
        %v1999 = vld [vmem:[%s6 + $0x70] sm:$0xff]
        %v2000 = vld [vmem:[%s6 + $0x78] sm:$0xff]
        %2002 = vset.pattern.permute.xlu0 0
        %2003 = vperm.xlu0 %2002, %v1985
        %v2004 = vpop.permute.xlu0 %2003
        %2007 = vset.pattern.permute.xlu0 0
        %2008 = vperm.xlu0 %2007, %v1986
        %v2009 = vpop.permute.xlu0 %2008
        %2012 = vset.pattern.permute.xlu0 0
        %2013 = vperm.xlu0 %2012, %v1987
        %v2014 = vpop.permute.xlu0 %2013
        %2017 = vset.pattern.permute.xlu0 0
        %2018 = vperm.xlu0 %2017, %v1988
        %v2019 = vpop.permute.xlu0 %2018
        %2022 = vset.pattern.permute.xlu0 0
        %2023 = vperm.xlu0 %2022, %v1989
        %v2024 = vpop.permute.xlu0 %2023
        %2027 = vset.pattern.permute.xlu0 0
        %2028 = vperm.xlu0 %2027, %v1990
        %v2029 = vpop.permute.xlu0 %2028
        %2032 = vset.pattern.permute.xlu0 0
        %2033 = vperm.xlu0 %2032, %v1991
        %v2034 = vpop.permute.xlu0 %2033
        %2037 = vset.pattern.permute.xlu0 0
        %2038 = vperm.xlu0 %2037, %v1992
        %v2039 = vpop.permute.xlu0 %2038
        %2042 = vset.pattern.permute.xlu0 0
        %2043 = vperm.xlu0 %2042, %v1993
        %v2044 = vpop.permute.xlu0 %2043
        %2047 = vset.pattern.permute.xlu0 0
        %2048 = vperm.xlu0 %2047, %v1994
        %v2049 = vpop.permute.xlu0 %2048
        %2052 = vset.pattern.permute.xlu0 0
        %2053 = vperm.xlu0 %2052, %v1995
        %v2054 = vpop.permute.xlu0 %2053
        %2057 = vset.pattern.permute.xlu0 0
        %2058 = vperm.xlu0 %2057, %v1996
        %v2059 = vpop.permute.xlu0 %2058
        %2062 = vset.pattern.permute.xlu0 0
        %2063 = vperm.xlu0 %2062, %v1997
        %v2064 = vpop.permute.xlu0 %2063
        %2067 = vset.pattern.permute.xlu0 0
        %2068 = vperm.xlu0 %2067, %v1998
        %v2069 = vpop.permute.xlu0 %2068
        %2072 = vset.pattern.permute.xlu0 0
        %2073 = vperm.xlu0 %2072, %v1999
        %v2074 = vpop.permute.xlu0 %2073
        %2077 = vset.pattern.permute.xlu0 0
        %2078 = vperm.xlu0 %2077, %v2000
        %v2079 = vpop.permute.xlu0 %2078
        %v2113 = vunpack.c.l.b16 %v1937
        %v2114 = vunpack.c.h.b16 %v1937
        %v2115 = vunpack.c.l.b16 %v1938
        %v2116 = vunpack.c.l.b16 %v1939
        %v2117 = vunpack.c.h.b16 %v1939
        %v2118 = vunpack.c.l.b16 %v1940
        %v2119 = vunpack.c.l.b16 %v1941
        %v2120 = vunpack.c.h.b16 %v1941
        %v2121 = vunpack.c.l.b16 %v1942
        %v2122 = vunpack.c.l.b16 %v1943
        %v2123 = vunpack.c.h.b16 %v1943
        %v2124 = vunpack.c.l.b16 %v1944
        %v2125 = vunpack.c.l.b16 %v1945
        %v2126 = vunpack.c.h.b16 %v1945
        %v2127 = vunpack.c.l.b16 %v1946
        %v2128 = vunpack.c.l.b16 %v1947
        %v2129 = vunpack.c.h.b16 %v1947
        %v2130 = vunpack.c.l.b16 %v1948
        %v2131 = vunpack.c.l.b16 %v1949
        %v2132 = vunpack.c.h.b16 %v1949
        %v2133 = vunpack.c.l.b16 %v1950
        %v2134 = vunpack.c.l.b16 %v1951
        %v2135 = vunpack.c.h.b16 %v1951
        %v2136 = vunpack.c.l.b16 %v1952
        %v2137 = vunpack.c.l.b16 %v1953
        %v2138 = vunpack.c.h.b16 %v1953
        %v2139 = vunpack.c.l.b16 %v1954
        %v2140 = vunpack.c.l.b16 %v1955
        %v2141 = vunpack.c.h.b16 %v1955
        %v2142 = vunpack.c.l.b16 %v1956
        %v2143 = vunpack.c.l.b16 %v1957
        %v2144 = vunpack.c.h.b16 %v1957
        %v2145 = vunpack.c.l.b16 %v1958
        %v2146 = vunpack.c.l.b16 %v1959
        %v2147 = vunpack.c.h.b16 %v1959
        %v2148 = vunpack.c.l.b16 %v1960
        %v2149 = vunpack.c.l.b16 %v1961
        %v2150 = vunpack.c.h.b16 %v1961
        %v2151 = vunpack.c.l.b16 %v1962
        %v2152 = vunpack.c.l.b16 %v1963
        %v2153 = vunpack.c.h.b16 %v1963
        %v2154 = vunpack.c.l.b16 %v1964
        %v2155 = vunpack.c.l.b16 %v1965
        %v2156 = vunpack.c.h.b16 %v1965
        %v2157 = vunpack.c.l.b16 %v1966
        %v2158 = vunpack.c.l.b16 %v1967
        %v2159 = vunpack.c.h.b16 %v1967
        %v2160 = vunpack.c.l.b16 %v1968
        %v2161 = vpack.c.b16 %v2116, %v2113
        %v2162 = vpack.c.b16 %v2117, %v2114
        %v2163 = vpack.c.b16 %v2118, %v2115
        %v2164 = vpack.c.b16 %v2122, %v2119
        %v2165 = vpack.c.b16 %v2123, %v2120
        %v2166 = vpack.c.b16 %v2124, %v2121
        %v2167 = vpack.c.b16 %v2128, %v2125
        %v2168 = vpack.c.b16 %v2129, %v2126
        %v2169 = vpack.c.b16 %v2130, %v2127
        %v2170 = vpack.c.b16 %v2134, %v2131
        %v2171 = vpack.c.b16 %v2135, %v2132
        %v2172 = vpack.c.b16 %v2136, %v2133
        %v2173 = vpack.c.b16 %v2140, %v2137
        %v2174 = vpack.c.b16 %v2141, %v2138
        %v2175 = vpack.c.b16 %v2142, %v2139
        %v2176 = vpack.c.b16 %v2146, %v2143
        %v2177 = vpack.c.b16 %v2147, %v2144
        %v2178 = vpack.c.b16 %v2148, %v2145
        %v2179 = vpack.c.b16 %v2152, %v2149
        %v2180 = vpack.c.b16 %v2153, %v2150
        %v2181 = vpack.c.b16 %v2154, %v2151
        %v2182 = vpack.c.b16 %v2158, %v2155
        %v2183 = vpack.c.b16 %v2159, %v2156
        %v2184 = vpack.c.b16 %v2160, %v2157
        %2209 = vmatprep.subr.bf16.mxu0 %v886
        %2210 = vmatpush1.bf16.msra.mxu0 %v885
        %2211 = vmatprep.subr.bf16.mxu0 %v884
        %2212 = vmatpush1.bf16.msra.mxu0 %v883
        %2213 = vmatprep.subr.bf16.mxu0 %v882
        %2214 = vmatpush1.bf16.msra.mxu0 %v881
        %2215 = vmatprep.subr.bf16.mxu0 %v880
        %2216 = vmatpush1.bf16.msra.mxu0 %v879
        %2217 = vmatprep.subr.bf16.mxu0 %v878
        %2218 = vmatpush1.bf16.msra.mxu0 %v877
        %2219 = vmatprep.subr.bf16.mxu0 %v876
        %2220 = vmatpush1.bf16.msra.mxu0 %v875
        %2221 = vmatprep.subr.bf16.mxu0 %v874
        %2222 = vmatpush1.bf16.msra.mxu0 %v873
        %2223 = vmatprep.subr.bf16.mxu0 %v872
        %2224 = vmatpush1.bf16.msra.mxu0 %v871
        %2225 = vmatprep.subr.bf16.mxu0 %v1411
        %2226 = vmatpush2.bf16.msra.mxu0 %v1410
        %2227 = vmatprep.subr.bf16.mxu0 %v1409
        %2228 = vmatpush2.bf16.msra.mxu0 %v1408
        %2229 = vmatprep.subr.bf16.mxu0 %v1407
        %2230 = vmatpush2.bf16.msra.mxu0 %v1406
        %2231 = vmatprep.subr.bf16.mxu0 %v1405
        %2232 = vmatpush2.bf16.msra.mxu0 %v1404
        %2233 = vmatprep.subr.bf16.mxu0 %v1403
        %2234 = vmatpush2.bf16.msra.mxu0 %v1402
        %2235 = vmatprep.subr.bf16.mxu0 %v1401
        %2236 = vmatpush2.bf16.msra.mxu0 %v1400
        %2237 = vmatprep.subr.bf16.mxu0 %v1399
        %2238 = vmatpush2.bf16.msra.mxu0 %v1398
        %2239 = vmatprep.subr.bf16.mxu0 %v1397
        %2240 = vmatpush2.bf16.msra.mxu0 %v1396
        %2241 = vmatprep.mubr.bf16.mxu0 %v2162
        %2242 = vmatmul.mubr.bf16.gmra.mxu0 %v2161
        %v2243 = vpop.f32.mrf.mxu0
        %v2244 = vadd.f32 %v2004, %v2243
        %v2245 = vpop.f32.mrf.mxu0
        %v2246 = vadd.f32 %v2004, %v2245
        %v2247 = vpop.f32.mrf.mxu0
        %v2248 = vadd.f32 %v2009, %v2247
        %v2249 = vpop.f32.mrf.mxu0
        %v2250 = vadd.f32 %v2009, %v2249
        %2251 = vmatprep.mubr.bf16.mxu0 %v2165
        %2252 = vmatmul.mubr.bf16.gmra.mxu0 %v2164
        %v2253 = vpop.f32.mrf.mxu0
        %v2254 = vadd.f32 %v2014, %v2253
        %v2255 = vpop.f32.mrf.mxu0
        %v2256 = vadd.f32 %v2014, %v2255
        %v2257 = vpop.f32.mrf.mxu0
        %v2258 = vadd.f32 %v2019, %v2257
        %v2259 = vpop.f32.mrf.mxu0
        %v2260 = vadd.f32 %v2019, %v2259
        %2261 = vmatprep.mubr.bf16.mxu0 %v2168
        %2262 = vmatmul.mubr.bf16.gmra.mxu0 %v2167
        %v2263 = vpop.f32.mrf.mxu0
        %v2264 = vadd.f32 %v2024, %v2263
        %v2265 = vpop.f32.mrf.mxu0
        %v2266 = vadd.f32 %v2024, %v2265
        %v2267 = vpop.f32.mrf.mxu0
        %v2268 = vadd.f32 %v2029, %v2267
        %v2269 = vpop.f32.mrf.mxu0
        %v2270 = vadd.f32 %v2029, %v2269
        %2271 = vmatprep.mubr.bf16.mxu0 %v2171
        %2272 = vmatmul.mubr.bf16.gmra.mxu0 %v2170
        %v2273 = vpop.f32.mrf.mxu0
        %v2274 = vadd.f32 %v2034, %v2273
        %v2275 = vpop.f32.mrf.mxu0
        %v2276 = vadd.f32 %v2034, %v2275
        %v2277 = vpop.f32.mrf.mxu0
        %v2278 = vadd.f32 %v2039, %v2277
        %v2279 = vpop.f32.mrf.mxu0
        %v2280 = vadd.f32 %v2039, %v2279
        %2281 = vmatprep.mubr.bf16.mxu0 %v2174
        %2282 = vmatmul.mubr.bf16.gmra.mxu0 %v2173
        %v2283 = vpop.f32.mrf.mxu0
        %v2284 = vadd.f32 %v2044, %v2283
        %v2285 = vpop.f32.mrf.mxu0
        %v2286 = vadd.f32 %v2044, %v2285
        %v2287 = vpop.f32.mrf.mxu0
        %v2288 = vadd.f32 %v2049, %v2287
        %v2289 = vpop.f32.mrf.mxu0
        %v2290 = vadd.f32 %v2049, %v2289
        %2291 = vmatprep.mubr.bf16.mxu0 %v2177
        %2292 = vmatmul.mubr.bf16.gmra.mxu0 %v2176
        %v2293 = vpop.f32.mrf.mxu0
        %v2294 = vadd.f32 %v2054, %v2293
        %v2295 = vpop.f32.mrf.mxu0
        %v2296 = vadd.f32 %v2054, %v2295
        %v2297 = vpop.f32.mrf.mxu0
        %v2298 = vadd.f32 %v2059, %v2297
        %v2299 = vpop.f32.mrf.mxu0
        %v2300 = vadd.f32 %v2059, %v2299
        %2301 = vmatprep.mubr.bf16.mxu0 %v2180
        %2302 = vmatmul.mubr.bf16.gmra.mxu0 %v2179
        %v2303 = vpop.f32.mrf.mxu0
        %v2304 = vadd.f32 %v2064, %v2303
        %v2305 = vpop.f32.mrf.mxu0
        %v2306 = vadd.f32 %v2064, %v2305
        %v2307 = vpop.f32.mrf.mxu0
        %v2308 = vadd.f32 %v2069, %v2307
        %v2309 = vpop.f32.mrf.mxu0
        %v2310 = vadd.f32 %v2069, %v2309
        %2311 = vmatprep.mubr.bf16.mxu0 %v2183
        %2312 = vmatmul.mubr.bf16.gmra.mxu0 %v2182
        %v2313 = vpop.f32.mrf.mxu0
        %v2314 = vadd.f32 %v2074, %v2313
        %v2315 = vpop.f32.mrf.mxu0
        %v2316 = vadd.f32 %v2074, %v2315
        %v2317 = vpop.f32.mrf.mxu0
        %v2318 = vadd.f32 %v2079, %v2317
        %v2319 = vpop.f32.mrf.mxu0
        %v2320 = vadd.f32 %v2079, %v2319
        %2321 = vdwg.mxu0
        %2322 = vmatprep.subr.bf16.mxu0 %v1936
        %2323 = vmatpush1.bf16.msra.mxu0 %v1935
        %2324 = vmatprep.subr.bf16.mxu0 %v1934
        %2325 = vmatpush1.bf16.msra.mxu0 %v1933
        %2326 = vmatprep.subr.bf16.mxu0 %v1932
        %2327 = vmatpush1.bf16.msra.mxu0 %v1931
        %2328 = vmatprep.subr.bf16.mxu0 %v1930
        %2329 = vmatpush1.bf16.msra.mxu0 %v1929
        %2330 = vmatprep.subr.bf16.mxu0 %v1928
        %2331 = vmatpush1.bf16.msra.mxu0 %v1927
        %2332 = vmatprep.subr.bf16.mxu0 %v1926
        %2333 = vmatpush1.bf16.msra.mxu0 %v1925
        %2334 = vmatprep.subr.bf16.mxu0 %v1924
        %2335 = vmatpush1.bf16.msra.mxu0 %v1923
        %2336 = vmatprep.subr.bf16.mxu0 %v1922
        %2337 = vmatpush1.bf16.msra.mxu0 %v1921
        %2338 = vmatprep.subr.bf16.mxu0 0
        %2339 = vmatpush2.bf16.msra.mxu0 0
        %2340 = vmatprep.subr.bf16.mxu0 0
        %2341 = vmatpush2.bf16.msra.mxu0 0
        %2342 = vmatprep.subr.bf16.mxu0 0
        %2343 = vmatpush2.bf16.msra.mxu0 0
        %2344 = vmatprep.subr.bf16.mxu0 0
        %2345 = vmatpush2.bf16.msra.mxu0 0
        %2346 = vmatprep.subr.bf16.mxu0 0
        %2347 = vmatpush2.bf16.msra.mxu0 0
        %2348 = vmatprep.subr.bf16.mxu0 0
        %2349 = vmatpush2.bf16.msra.mxu0 0
        %2350 = vmatprep.subr.bf16.mxu0 0
        %2351 = vmatpush2.bf16.msra.mxu0 0
        %2352 = vmatprep.subr.bf16.mxu0 0
        %2353 = vmatpush2.bf16.msra.mxu0 0
        %2354 = vmatprep.mubr.bf16.mxu0 0
        %2355 = vmatmul.mubr.bf16.gmra.mxu0 %v2163
        %v2356 = vpop.f32.mrf.mxu0
        %v2357 = vadd.f32 %v2244, %v2356
        %v2358 = vpop.f32.mrf.mxu0
        %v2359 = vadd.f32 %v2246, %v2358
        %v2360 = vpop.f32.mrf.mxu0
        %v2361 = vadd.f32 %v2248, %v2360
        %v2362 = vpop.f32.mrf.mxu0
        %v2363 = vadd.f32 %v2250, %v2362
        %2364 = vmatprep.mubr.bf16.mxu0 0
        %2365 = vmatmul.mubr.bf16.gmra.mxu0 %v2166
        %v2366 = vpop.f32.mrf.mxu0
        %v2367 = vadd.f32 %v2254, %v2366
        %v2368 = vpop.f32.mrf.mxu0
        %v2369 = vadd.f32 %v2256, %v2368
        %v2370 = vpop.f32.mrf.mxu0
        %v2371 = vadd.f32 %v2258, %v2370
        %v2372 = vpop.f32.mrf.mxu0
        %v2373 = vadd.f32 %v2260, %v2372
        %2374 = vmatprep.mubr.bf16.mxu0 0
        %2375 = vmatmul.mubr.bf16.gmra.mxu0 %v2169
        %v2376 = vpop.f32.mrf.mxu0
        %v2377 = vadd.f32 %v2264, %v2376
        %v2378 = vpop.f32.mrf.mxu0
        %v2379 = vadd.f32 %v2266, %v2378
        %v2380 = vpop.f32.mrf.mxu0
        %v2381 = vadd.f32 %v2268, %v2380
        %v2382 = vpop.f32.mrf.mxu0
        %v2383 = vadd.f32 %v2270, %v2382
        %2384 = vmatprep.mubr.bf16.mxu0 0
        %2385 = vmatmul.mubr.bf16.gmra.mxu0 %v2172
        %v2386 = vpop.f32.mrf.mxu0
        %v2387 = vadd.f32 %v2274, %v2386
        %v2388 = vpop.f32.mrf.mxu0
        %v2389 = vadd.f32 %v2276, %v2388
        %v2390 = vpop.f32.mrf.mxu0
        %v2391 = vadd.f32 %v2278, %v2390
        %v2392 = vpop.f32.mrf.mxu0
        %v2393 = vadd.f32 %v2280, %v2392
        %2394 = vmatprep.mubr.bf16.mxu0 0
        %2395 = vmatmul.mubr.bf16.gmra.mxu0 %v2175
        %v2396 = vpop.f32.mrf.mxu0
        %v2397 = vadd.f32 %v2284, %v2396
        %v2398 = vpop.f32.mrf.mxu0
        %v2399 = vadd.f32 %v2286, %v2398
        %v2400 = vpop.f32.mrf.mxu0
        %v2401 = vadd.f32 %v2288, %v2400
        %v2402 = vpop.f32.mrf.mxu0
        %v2403 = vadd.f32 %v2290, %v2402
        %2404 = vmatprep.mubr.bf16.mxu0 0
        %2405 = vmatmul.mubr.bf16.gmra.mxu0 %v2178
        %v2406 = vpop.f32.mrf.mxu0
        %v2407 = vadd.f32 %v2294, %v2406
        %v2408 = vpop.f32.mrf.mxu0
        %v2409 = vadd.f32 %v2296, %v2408
        %v2410 = vpop.f32.mrf.mxu0
        %v2411 = vadd.f32 %v2298, %v2410
        %v2412 = vpop.f32.mrf.mxu0
        %v2413 = vadd.f32 %v2300, %v2412
        %2414 = vmatprep.mubr.bf16.mxu0 0
        %2415 = vmatmul.mubr.bf16.gmra.mxu0 %v2181
        %v2416 = vpop.f32.mrf.mxu0
        %v2417 = vadd.f32 %v2304, %v2416
        %v2418 = vpop.f32.mrf.mxu0
        %v2419 = vadd.f32 %v2306, %v2418
        %v2420 = vpop.f32.mrf.mxu0
        %v2421 = vadd.f32 %v2308, %v2420
        %v2422 = vpop.f32.mrf.mxu0
        %v2423 = vadd.f32 %v2310, %v2422
        %2424 = vmatprep.mubr.bf16.mxu0 0
        %2425 = vmatmul.mubr.bf16.gmra.mxu0 %v2184
        %v2426 = vpop.f32.mrf.mxu0
        %v2427 = vadd.f32 %v2314, %v2426
        %v2428 = vpop.f32.mrf.mxu0
        %v2429 = vadd.f32 %v2316, %v2428
        %v2430 = vpop.f32.mrf.mxu0
        %v2431 = vadd.f32 %v2318, %v2430
        %v2432 = vpop.f32.mrf.mxu0
        %v2433 = vadd.f32 %v2320, %v2432
        %2434 = vdwg.mxu0
        %v2435 = vmul.f32 %v2357, %v1982
        %v2436 = vmul.f32 %v2359, %v1984
        %v2437 = vmul.f32 %v2361, %v1982
        %v2438 = vmul.f32 %v2363, %v1984
        %v2439 = vmul.f32 %v2367, %v1982
        %v2440 = vmul.f32 %v2369, %v1984
        %v2441 = vmul.f32 %v2371, %v1982
        %v2442 = vmul.f32 %v2373, %v1984
        %v2443 = vmul.f32 %v2377, %v1982
        %v2444 = vmul.f32 %v2379, %v1984
        %v2445 = vmul.f32 %v2381, %v1982
        %v2446 = vmul.f32 %v2383, %v1984
        %v2447 = vmul.f32 %v2387, %v1982
        %v2448 = vmul.f32 %v2389, %v1984
        %v2449 = vmul.f32 %v2391, %v1982
        %v2450 = vmul.f32 %v2393, %v1984
        %v2451 = vmul.f32 %v2397, %v1982
        %v2452 = vmul.f32 %v2399, %v1984
        %v2453 = vmul.f32 %v2401, %v1982
        %v2454 = vmul.f32 %v2403, %v1984
        %v2455 = vmul.f32 %v2407, %v1982
        %v2456 = vmul.f32 %v2409, %v1984
        %v2457 = vmul.f32 %v2411, %v1982
        %v2458 = vmul.f32 %v2413, %v1984
        %v2459 = vmul.f32 %v2417, %v1982
        %v2460 = vmul.f32 %v2419, %v1984
        %v2461 = vmul.f32 %v2421, %v1982
        %v2462 = vmul.f32 %v2423, %v1984
        %v2463 = vmul.f32 %v2427, %v1982
        %v2464 = vmul.f32 %v2429, %v1984
        %v2465 = vmul.f32 %v2431, %v1982
        %v2466 = vmul.f32 %v2433, %v1984
        %s2467 = scalar_lea.vmem %s6, 128
        %v2468 = vld [vmem:[%s2467] sm:$0xff]
        %v2469 = vld [vmem:[%s2467 + $0x8] sm:$0xff]
        %v2470 = vld [vmem:[%s2467 + $0x10] sm:$0xff]
        %v2471 = vld [vmem:[%s2467 + $0x18] sm:$0xff]
        %v2472 = vld [vmem:[%s2467 + $0x20] sm:$0xff]
        %v2473 = vld [vmem:[%s2467 + $0x28] sm:$0xff]
        %v2474 = vld [vmem:[%s2467 + $0x30] sm:$0xff]
        %v2475 = vld [vmem:[%s2467 + $0x38] sm:$0xff]
        %v2476 = vld [vmem:[%s2467 + $0x40] sm:$0xff]
        %v2477 = vld [vmem:[%s2467 + $0x48] sm:$0xff]
        %v2478 = vld [vmem:[%s2467 + $0x50] sm:$0xff]
        %v2479 = vld [vmem:[%s2467 + $0x58] sm:$0xff]
        %v2480 = vld [vmem:[%s2467 + $0x60] sm:$0xff]
        %v2481 = vld [vmem:[%s2467 + $0x68] sm:$0xff]
        %v2482 = vld [vmem:[%s2467 + $0x70] sm:$0xff]
        %v2483 = vld [vmem:[%s2467 + $0x78] sm:$0xff]
        %2485 = vset.pattern.permute.xlu0 0
        %2486 = vperm.xlu0 %2485, %v2468
        %v2487 = vpop.permute.xlu0 %2486
        %2490 = vset.pattern.permute.xlu0 0
        %2491 = vperm.xlu0 %2490, %v2469
        %v2492 = vpop.permute.xlu0 %2491
        %2495 = vset.pattern.permute.xlu0 0
        %2496 = vperm.xlu0 %2495, %v2470
        %v2497 = vpop.permute.xlu0 %2496
        %2500 = vset.pattern.permute.xlu0 0
        %2501 = vperm.xlu0 %2500, %v2471
        %v2502 = vpop.permute.xlu0 %2501
        %2505 = vset.pattern.permute.xlu0 0
        %2506 = vperm.xlu0 %2505, %v2472
        %v2507 = vpop.permute.xlu0 %2506
        %2510 = vset.pattern.permute.xlu0 0
        %2511 = vperm.xlu0 %2510, %v2473
        %v2512 = vpop.permute.xlu0 %2511
        %2515 = vset.pattern.permute.xlu0 0
        %2516 = vperm.xlu0 %2515, %v2474
        %v2517 = vpop.permute.xlu0 %2516
        %2520 = vset.pattern.permute.xlu0 0
        %2521 = vperm.xlu0 %2520, %v2475
        %v2522 = vpop.permute.xlu0 %2521
        %2525 = vset.pattern.permute.xlu0 0
        %2526 = vperm.xlu0 %2525, %v2476
        %v2527 = vpop.permute.xlu0 %2526
        %2530 = vset.pattern.permute.xlu0 0
        %2531 = vperm.xlu0 %2530, %v2477
        %v2532 = vpop.permute.xlu0 %2531
        %2535 = vset.pattern.permute.xlu0 0
        %2536 = vperm.xlu0 %2535, %v2478
        %v2537 = vpop.permute.xlu0 %2536
        %2540 = vset.pattern.permute.xlu0 0
        %2541 = vperm.xlu0 %2540, %v2479
        %v2542 = vpop.permute.xlu0 %2541
        %2545 = vset.pattern.permute.xlu0 0
        %2546 = vperm.xlu0 %2545, %v2480
        %v2547 = vpop.permute.xlu0 %2546
        %2550 = vset.pattern.permute.xlu0 0
        %2551 = vperm.xlu0 %2550, %v2481
        %v2552 = vpop.permute.xlu0 %2551
        %2555 = vset.pattern.permute.xlu0 0
        %2556 = vperm.xlu0 %2555, %v2482
        %v2557 = vpop.permute.xlu0 %2556
        %2560 = vset.pattern.permute.xlu0 0
        %2561 = vperm.xlu0 %2560, %v2483
        %v2562 = vpop.permute.xlu0 %2561
        %v2564 = vadd.f32 %v2435, %v2487
        %v2565 = vadd.f32 %v2436, %v2487
        %v2566 = vadd.f32 %v2437, %v2492
        %v2567 = vadd.f32 %v2438, %v2492
        %v2568 = vadd.f32 %v2439, %v2497
        %v2569 = vadd.f32 %v2440, %v2497
        %v2570 = vadd.f32 %v2441, %v2502
        %v2571 = vadd.f32 %v2442, %v2502
        %v2572 = vadd.f32 %v2443, %v2507
        %v2573 = vadd.f32 %v2444, %v2507
        %v2574 = vadd.f32 %v2445, %v2512
        %v2575 = vadd.f32 %v2446, %v2512
        %v2576 = vadd.f32 %v2447, %v2517
        %v2577 = vadd.f32 %v2448, %v2517
        %v2578 = vadd.f32 %v2449, %v2522
        %v2579 = vadd.f32 %v2450, %v2522
        %v2580 = vadd.f32 %v2451, %v2527
        %v2581 = vadd.f32 %v2452, %v2527
        %v2582 = vadd.f32 %v2453, %v2532
        %v2583 = vadd.f32 %v2454, %v2532
        %v2584 = vadd.f32 %v2455, %v2537
        %v2585 = vadd.f32 %v2456, %v2537
        %v2586 = vadd.f32 %v2457, %v2542
        %v2587 = vadd.f32 %v2458, %v2542
        %v2588 = vadd.f32 %v2459, %v2547
        %v2589 = vadd.f32 %v2460, %v2547
        %v2590 = vadd.f32 %v2461, %v2552
        %v2591 = vadd.f32 %v2462, %v2552
        %v2592 = vadd.f32 %v2463, %v2557
        %v2593 = vadd.f32 %v2464, %v2557
        %v2594 = vadd.f32 %v2465, %v2562
        %v2595 = vadd.f32 %v2466, %v2562
        %v2596 = vpack.c.bf16 %v2566, %v2564
        %v2597 = vpack.c.bf16 %v2567, %v2565
        %v2598 = vpack.c.bf16 %v2570, %v2568
        %v2599 = vpack.c.bf16 %v2571, %v2569
        %v2600 = vpack.c.bf16 %v2574, %v2572
        %v2601 = vpack.c.bf16 %v2575, %v2573
        %v2602 = vpack.c.bf16 %v2578, %v2576
        %v2603 = vpack.c.bf16 %v2579, %v2577
        %v2604 = vpack.c.bf16 %v2582, %v2580
        %v2605 = vpack.c.bf16 %v2583, %v2581
        %v2606 = vpack.c.bf16 %v2586, %v2584
        %v2607 = vpack.c.bf16 %v2587, %v2585
        %v2608 = vpack.c.bf16 %v2590, %v2588
        %v2609 = vpack.c.bf16 %v2591, %v2589
        %v2610 = vpack.c.bf16 %v2594, %v2592
        %v2611 = vpack.c.bf16 %v2595, %v2593
        %v2628 = vunpack.c.l.b16 %v2596
        %v2629 = vunpack.c.l.b16 %v2597
        %v2630 = vunpack.c.h.b16 %v2596
        %v2631 = vunpack.c.h.b16 %v2597
        %v2632 = vunpack.c.l.b16 %v2598
        %v2633 = vunpack.c.l.b16 %v2599
        %v2634 = vunpack.c.h.b16 %v2598
        %v2635 = vunpack.c.h.b16 %v2599
        %v2636 = vunpack.c.l.b16 %v2600
        %v2637 = vunpack.c.l.b16 %v2601
        %v2638 = vunpack.c.h.b16 %v2600
        %v2639 = vunpack.c.h.b16 %v2601
        %v2640 = vunpack.c.l.b16 %v2602
        %v2641 = vunpack.c.l.b16 %v2603
        %v2642 = vunpack.c.h.b16 %v2602
        %v2643 = vunpack.c.h.b16 %v2603
        %v2644 = vunpack.c.l.b16 %v2604
        %v2645 = vunpack.c.l.b16 %v2605
        %v2646 = vunpack.c.h.b16 %v2604
        %v2647 = vunpack.c.h.b16 %v2605
        %v2648 = vunpack.c.l.b16 %v2606
        %v2649 = vunpack.c.l.b16 %v2607
        %v2650 = vunpack.c.h.b16 %v2606
        %v2651 = vunpack.c.h.b16 %v2607
        %v2652 = vunpack.c.l.b16 %v2608
        %v2653 = vunpack.c.l.b16 %v2609
        %v2654 = vunpack.c.h.b16 %v2608
        %v2655 = vunpack.c.h.b16 %v2609
        %v2656 = vunpack.c.l.b16 %v2610
        %v2657 = vunpack.c.l.b16 %v2611
        %v2658 = vunpack.c.h.b16 %v2610
        %v2659 = vunpack.c.h.b16 %v2611
        %v2660 = vpack.c.b16 %v2629, %v2628
        %v2661 = vpack.c.b16 %v2631, %v2630
        %v2662 = vpack.c.b16 %v2633, %v2632
        %v2663 = vpack.c.b16 %v2635, %v2634
        %v2664 = vpack.c.b16 %v2637, %v2636
        %v2665 = vpack.c.b16 %v2639, %v2638
        %v2666 = vpack.c.b16 %v2641, %v2640
        %v2667 = vpack.c.b16 %v2643, %v2642
        %v2668 = vpack.c.b16 %v2645, %v2644
        %v2669 = vpack.c.b16 %v2647, %v2646
        %v2670 = vpack.c.b16 %v2649, %v2648
        %v2671 = vpack.c.b16 %v2651, %v2650
        %v2672 = vpack.c.b16 %v2653, %v2652
        %v2673 = vpack.c.b16 %v2655, %v2654
        %v2674 = vpack.c.b16 %v2657, %v2656
        %v2675 = vpack.c.b16 %v2659, %v2658
        %2692 = vst [vmem:[%s361] sm:$0xff] %v2660
        %2693 = vst [vmem:[%s361 + $0x8] sm:$0xff] %v2661
        %2694 = vst [vmem:[%s361 + $0x10] sm:$0xff] %v2662
        %2695 = vst [vmem:[%s361 + $0x18] sm:$0xff] %v2663
        %2696 = vst [vmem:[%s361 + $0x20] sm:$0xff] %v2664
        %2697 = vst [vmem:[%s361 + $0x28] sm:$0xff] %v2665
        %2698 = vst [vmem:[%s361 + $0x30] sm:$0xff] %v2666
        %2699 = vst [vmem:[%s361 + $0x38] sm:$0xff] %v2667
        %2700 = vst [vmem:[%s361 + $0x40] sm:$0xff] %v2668
        %2701 = vst [vmem:[%s361 + $0x48] sm:$0xff] %v2669
        %2702 = vst [vmem:[%s361 + $0x50] sm:$0xff] %v2670
        %2703 = vst [vmem:[%s361 + $0x58] sm:$0xff] %v2671
        %2704 = vst [vmem:[%s361 + $0x60] sm:$0xff] %v2672
        %2705 = vst [vmem:[%s361 + $0x68] sm:$0xff] %v2673
        %2706 = vst [vmem:[%s361 + $0x70] sm:$0xff] %v2674
        %2707 = vst [vmem:[%s361 + $0x78] sm:$0xff] %v2675
        %s2708 = sand.u32 %s198, 1
        %s2709 = scalar_lea.sflag [#allocation5], %s2708
        %s2710 = sand.u32 %s198, 1
        %s2711 = smul.addr %s2710, 128
        %s2712 = scalar_lea.vmem [#allocation4], %s2711
        // Predicated region
        $region72: #{tpu_custom_call.1} parent=66 // pred_check
          %p2713 = pneg %p208
        $region73: #{tpu_custom_call.1} parent=66 // pred_check_branch
          %2715 = sbr.rel (%p2713) target = $region75
        $region74: #{tpu_custom_call.1} parent=66 // pred_region
          %s2716 = smul.u32 2, %s27
          %s2718 = ssub.s32 2048, 2048
          %2719 = vsyncadd %s2709, %s2718
          %s2720 = smul.addr %s26, 32
          %s2721 = sadd.s32 %s2716, %s2720
          %s2722 = smul.addr %s2721, 64
          %s2723 = scalar_lea.hbm %s7, %s2722
          %s2724 = sshll.u32 %s2712, 4
          %s2725 = int_to_ptr.vmem [resolvable:$true] %s2724
          %2730 = dma.vmem_to_hbm [thread:$0]  %s2725, 2048, %s2723, %s2709, 128, 128, 8
        $region75: #{tpu_custom_call.1} parent=66 // pred_fallthru
          _
      $region67: #{tpu_custom_call.1} parent=5 // pred_fallthru
        _
      %p2731 = scmp.le.s32.totalorder 2, %s17
      // Predicated region
      $region76: #{tpu_custom_call.1} parent=5 // pred_check
        %p2732 = pneg %p2731
      $region77: #{tpu_custom_call.1} parent=5 // pred_check_branch
        %2734 = sbr.rel (%p2732) target = $region79
      $region78: #{tpu_custom_call.1} parent=5 // pred_region
        %s2735 = ssub.s32 %s17, 2
        // Predicated region
        $region80: #{tpu_custom_call.1} parent=78 // pred_check
          %p2736 = pneg %p214
        $region81: #{tpu_custom_call.1} parent=78 // pred_check_branch
          %2738 = sbr.rel (%p2736) target = $region83
        $region82: #{tpu_custom_call.1} parent=78 // pred_region
          %s2739 = sand.u32 %s199, 1
          %s2740 = scalar_lea.sflag [#allocation5], %s2739
          %s2741 = sand.u32 %s199, 1
          %s2742 = smul.addr %s2741, 128
          %s2743 = scalar_lea.vmem [#allocation4], %s2742
          %2744 = dma.done %s2740, 2048
        $region83: #{tpu_custom_call.1} parent=78 // pred_fallthru
          _
      $region79: #{tpu_custom_call.1} parent=5 // pred_fallthru
        _
    $region6: #{tpu_custom_call.1} parent=1 // loop_footer
      %s21 = sadd.s32 1, %s17
    $region7: #{tpu_custom_call.1} parent=1 // loop_footer_branch
      %16 = sbr.rel target = $region3
    $region8: #{tpu_custom_call.1} parent=1 // loop_exit
      _
    %2745 = vsyncpa [#allocation5], 1
    %s2746 = scalar_lea.sflag [#allocation5], 1
    %2747 = vsyncpa %s2746, 1

</llo_original>
